<compile_context>
chip_gen: v5e
topology: v5e:2x2
jax: 0.10.0
libtpu: 0.0.40
codegen_flags: <defaults>
</compile_context>

<pallas_src>
import functools

import jax
import jax.numpy as jnp
from jax.experimental import pallas as pl
from jax.experimental.pallas import tpu as pltpu

EPS = 1e-5


# ----------------------------------------------------------------------------
# Fused Pallas kernel: whole DecoderBlock forward in one invocation
# ----------------------------------------------------------------------------
def _decoder_block_kernel(x_ref, skip_ref, w0_ref, wsk_ref, w1_ref, w2_ref,
                          w3_ref, w4_ref, g_ref, b_ref, out_ref,
                          *, H, W, R, COUT):
    # x_ref    : (R, W*Cin)    f32  upsampled input, lane-dense rows (lane = j*C + c)
    # skip_ref : (R, W*Cskip)  f32  skip input
    # w0/wsk   : (W*Cin, W*Cout) / (W*Cskip, W*Cout) bf16 block-diagonal 1x1 weights
    # w1..w4   : (3, W*Cin, W*Cout) bf16 block-banded 3x3 weights (index = ky)
    # g_ref/b_ref : (6, 1, W*Cout) f32 per-lane-tiled BN gamma/beta, order
    #               [conv0, conv_skip, conv1, conv2, conv3, conv4]
    # out_ref  : (R, W*Cout)   f32  lane-dense output
    f32 = jnp.float32
    bf16 = jnp.bfloat16
    LANES = W * COUT
    inv_count = 1.0 / float(R * W)            # per-channel element count N*H*W

    # Row index -> spatial row i inside its image (rows are (n, i) row-major).
    # Hoisted once and shared by all four 3x3 convs.
    row = jax.lax.broadcasted_iota(jnp.int32, (R, 1), 0)
    i_pos = row % H
    top_ok = i_pos > 0            # row i-1 exists in the same image
    bot_ok = i_pos < (H - 1)      # row i+1 exists in the same image

    def lane_group_sum(v):
        # v: (1, LANES) f32 with lane = j*COUT + c.  Sum over the W lane groups
        # per channel and broadcast back to every lane using log2(W) exact-f32
        # XLU lane rotations (no MXU, no relayout).
        s = v
        sh = COUT
        while sh < LANES:
            s = s + pltpu.roll(s, sh, 1)
            sh *= 2
        return s

    def bn_relu(y, idx):
        # Training-mode BatchNorm2d: one-pass biased batch stats
        # (var = E[y^2] - E[y]^2), affine, ReLU.  Conv bias omitted upstream
        # because the mean subtraction cancels it exactly.
        s1 = lane_group_sum(jnp.sum(y, axis=0, keepdims=True))
        s2 = lane_group_sum(jnp.sum(y * y, axis=0, keepdims=True))
        mean = s1 * inv_count
        var = s2 * inv_count - mean * mean
        scale = g_ref[idx] * jax.lax.rsqrt(var + EPS)
        shift = b_ref[idx] - mean * scale
        return jnp.maximum(y * scale + shift, 0.0)

    def conv1x1(src_bf16, w_ref_):
        return jnp.dot(src_bf16, w_ref_[...], preferred_element_type=f32)

    def conv3x3(src_f32, w3_ref):
        # src: (R, K) f32.  w3_ref[ky] multiplies the image row i + ky - 1;
        # the dx taps / left-right zero padding are inside the banded weight.
        K = src_f32.shape[1]
        zrow = jnp.zeros((1, K), f32)
        mid = src_f32.astype(bf16)
        top = jnp.where(top_ok,
                        jnp.concatenate([zrow, src_f32[:-1, :]], axis=0),
                        0.0).astype(bf16)
        bot = jnp.where(bot_ok,
                        jnp.concatenate([src_f32[1:, :], zrow], axis=0),
                        0.0).astype(bf16)
        y = jnp.dot(top, w3_ref[0], preferred_element_type=f32)
        y = y + jnp.dot(mid, w3_ref[1], preferred_element_type=f32)
        y = y + jnp.dot(bot, w3_ref[2], preferred_element_type=f32)
        return y

    x = x_ref[...]          # (R, W*Cin)
    sk = skip_ref[...]      # (R, W*Cskip)

    proj = bn_relu(conv1x1(x.astype(bf16), w0_ref), 0)     # conv0 (1x1)
    a = bn_relu(conv3x3(x, w1_ref), 2)                      # conv1 (3x3)
    s = bn_relu(conv1x1(sk.astype(bf16), wsk_ref), 1)       # conv_skip (1x1)

    t = a + s                                               # conv1(x) + conv_skip(skip)
    x2 = proj + bn_relu(conv3x3(t, w2_ref), 3)              # proj + conv2(t)
    c = bn_relu(conv3x3(x2, w3_ref), 4)                     # conv3(x2)
    out_ref[...] = x2 + bn_relu(conv3x3(c, w4_ref), 5)      # x2 + conv4(c)


# ----------------------------------------------------------------------------
# Wrapper: lane-dense layout conversion, weight packing, single pallas_call
# ----------------------------------------------------------------------------
def _blockdiag_1x1(w, W):
    # (cout, cin, 1, 1) -> block-diagonal (W*cin, W*cout) bf16
    cout, cin = w.shape[0], w.shape[1]
    blk = w.reshape(cout, cin).T
    return jnp.kron(jnp.eye(W, dtype=w.dtype), blk).astype(jnp.bfloat16)


def _banded_3x3(w, W):
    # (cout, cin, 3, 3) -> (3, W*cin, W*cout) bf16; entry [ky] is the block-
    # banded matrix mixing dx in {-1,0,1} and channels for image row i+ky-1.
    cout, cin = w.shape[0], w.shape[1]
    mats = []
    for ky in range(3):
        m = jnp.zeros((W * cin, W * cout), w.dtype)
        for kx in range(3):
            dx = kx - 1
            shift = jnp.eye(W, k=-dx, dtype=w.dtype)     # j_in = j_out + dx
            m = m + jnp.kron(shift, w[:, :, ky, kx].T)
        mats.append(m)
    return jnp.stack(mats).astype(jnp.bfloat16)


def _tile_bn(v, W):
    # per-channel (cout,) -> per-lane (1, W*cout), lane = j*cout + c
    return jnp.tile(v, (W,)).reshape(1, -1)


def decoder_block_forward(params, x_nchw, skip_nchw):
    N, cin, h, w = x_nchw.shape
    cskip = skip_nchw.shape[1]
    cout = params["conv0"]["w"].shape[0]
    H, W = 2 * h, 2 * w
    R = N * H
    assert (W & (W - 1)) == 0, "lane-group fold reduction assumes W is a power of two"
    # TODO(synk): generalize lane-dense packing when W*cout > 128 (add a row grid).

    # NCHW -> NHWC, nearest 2x upsample (tiny), lane-dense (N*H, W*C) rows.
    x = jnp.transpose(x_nchw, (0, 2, 3, 1))
    x = jnp.repeat(jnp.repeat(x, 2, axis=1), 2, axis=2)
    x_rows = x.reshape(R, W * cin)
    skip_rows = jnp.transpose(skip_nchw, (0, 2, 3, 1)).reshape(R, W * cskip)

    order = ("conv0", "conv_skip", "conv1", "conv2", "conv3", "conv4")
    gammas = jnp.stack([_tile_bn(params[k]["gamma"], W) for k in order])  # (6,1,W*cout)
    betas = jnp.stack([_tile_bn(params[k]["beta"], W) for k in order])
    # Conv biases are NOT passed: exactly cancelled by train-mode BN mean subtraction.

    vmem = pl.BlockSpec(memory_space=pltpu.MemorySpace.VMEM)
    kernel = functools.partial(_decoder_block_kernel, H=H, W=W, R=R, COUT=cout)
    out_rows = pl.pallas_call(
        kernel,
        out_shape=jax.ShapeDtypeStruct((R, W * cout), jnp.float32),
        in_specs=[vmem] * 10,
        out_specs=vmem,
    )(x_rows, skip_rows,
      _blockdiag_1x1(params["conv0"]["w"], W),
      _blockdiag_1x1(params["conv_skip"]["w"], W),
      _banded_3x3(params["conv1"]["w"], W),
      _banded_3x3(params["conv2"]["w"], W),
      _banded_3x3(params["conv3"]["w"], W),
      _banded_3x3(params["conv4"]["w"], W),
      gammas, betas)
    return jnp.transpose(out_rows.reshape(N, H, W, cout), (0, 3, 1, 2))


# ----------------------------------------------------------------------------
# Parameter init (matches conv_norm_act(in, out, sz, 'batch', 'ReLU'))
# ----------------------------------------------------------------------------
def init_cna(key, cin, cout, ksz):
    kw, kb, kg, kbe = jax.random.split(key, 4)
    return dict(
        w=jax.random.normal(kw, (cout, cin, ksz, ksz), jnp.float32) * 0.1,
        b=jax.random.normal(kb, (cout,), jnp.float32) * 0.1,
        gamma=1.0 + 0.1 * jax.random.normal(kg, (cout,), jnp.float32),
        beta=0.1 * jax.random.normal(kbe, (cout,), jnp.float32),
    )


def init_decoder_block(key, in_channels, skip_channels, out_channels):
    ks = jax.random.split(key, 6)
    return dict(
        conv0=init_cna(ks[0], in_channels, out_channels, 1),
        conv_skip=init_cna(ks[1], skip_channels, out_channels, 1),
        conv1=init_cna(ks[2], in_channels, out_channels, 3),
        conv2=init_cna(ks[3], out_channels, out_channels, 3),
        conv3=init_cna(ks[4], out_channels, out_channels, 3),
        conv4=init_cna(ks[5], out_channels, out_channels, 3),
    )


# ----------------------------------------------------------------------------
# Pure-JAX reference (faithful, f32) for the correctness check
# ----------------------------------------------------------------------------
def _ref_cna(p, x_nhwc):
    w = p["w"]
    cout, ksz = w.shape[0], w.shape[2]
    y = jax.lax.conv_general_dilated(
        x_nhwc, jnp.transpose(w, (2, 3, 1, 0)),
        window_strides=(1, 1), padding=[(ksz // 2, ksz // 2)] * 2,
        dimension_numbers=("NHWC", "HWIO", "NHWC"))
    y = y + p["b"].reshape(1, 1, 1, cout)
    mean = jnp.mean(y, axis=(0, 1, 2), keepdims=True)
    var = jnp.mean((y - mean) ** 2, axis=(0, 1, 2), keepdims=True)
    y = (y - mean) / jnp.sqrt(var + EPS)
    y = y * p["gamma"].reshape(1, 1, 1, cout) + p["beta"].reshape(1, 1, 1, cout)
    return jnp.maximum(y, 0.0)


def _ref_forward(params, x_nchw, skip_nchw):
    x = jnp.transpose(x_nchw, (0, 2, 3, 1))
    skip = jnp.transpose(skip_nchw, (0, 2, 3, 1))
    x = jnp.repeat(jnp.repeat(x, 2, axis=1), 2, axis=2)
    proj = _ref_cna(params["conv0"], x)
    a = _ref_cna(params["conv1"], x)
    x2 = proj + _ref_cna(params["conv2"], a + _ref_cna(params["conv_skip"], skip))
    out = x2 + _ref_cna(params["conv4"], _ref_cna(params["conv3"], x2))
    return jnp.transpose(out, (0, 3, 1, 2))


if __name__ == "__main__":
    key = jax.random.PRNGKey(0)
    kp, kx, ks = jax.random.split(key, 3)

    in_channels, skip_channels, out_channels = 4, 6, 8
    N, Hin, Win = 2, 8, 8                     # upsampled to 16x16 inside forward

    params = init_decoder_block(kp, in_channels, skip_channels, out_channels)
    x = jax.random.normal(kx, (N, in_channels, Hin, Win), jnp.float32)
    skip = jax.random.normal(ks, (N, skip_channels, 2 * Hin, 2 * Win), jnp.float32)

    fwd = jax.jit(decoder_block_forward)
    out = jax.block_until_ready(fwd(params, x, skip))

    ref = jax.block_until_ready(_ref_forward(params, x, skip))
    assert out.shape == (N, out_channels, 2 * Hin, 2 * Win), out.shape
    err = jnp.sqrt(jnp.sum((out - ref) ** 2))
    scale = jnp.sqrt(jnp.sum(ref ** 2)) + 1e-8
    rel = float(err / scale)
    assert rel < 5e-2, f"relative L2 error too large: {rel}"

    print("KERNEL_OK")
</pallas_src>

<mosaic_0001>
module attributes {stable_mosaic.version = 11 : i64} {
  func.func @_decoder_block_kernel(%arg0: memref<32x64xf32, #tpu.memory_space<vmem>>, %arg1: memref<32x96xf32, #tpu.memory_space<vmem>>, %arg2: memref<64x128xbf16, #tpu.memory_space<vmem>>, %arg3: memref<96x128xbf16, #tpu.memory_space<vmem>>, %arg4: memref<3x64x128xbf16, #tpu.memory_space<vmem>>, %arg5: memref<3x128x128xbf16, #tpu.memory_space<vmem>>, %arg6: memref<3x128x128xbf16, #tpu.memory_space<vmem>>, %arg7: memref<3x128x128xbf16, #tpu.memory_space<vmem>>, %arg8: memref<6x1x128xf32, #tpu.memory_space<vmem>>, %arg9: memref<6x1x128xf32, #tpu.memory_space<vmem>>, %arg10: memref<32x128xf32, #tpu.memory_space<vmem>>) attributes {dimension_semantics = [], scalar_prefetch = 0 : i64, scratch_operands = 0 : i64, tpu.core_type = #tpu.core_type<tc>} {
    %0 = tpu.iota {dimensions = array<i32: 0>} : vector<32x1xi32>
    %c16_i32 = arith.constant 16 : i32
    %c0_i32 = arith.constant 0 : i32
    %1 = arith.cmpi eq, %c16_i32, %c0_i32 : i32
    %c1_i32 = arith.constant 1 : i32
    %2 = arith.select %1, %c1_i32, %c16_i32 : i32
    %3 = vector.broadcast %2 : i32 to vector<32x1xi32>
    %4 = arith.remsi %0, %3 : vector<32x1xi32>
    %c0_i32_0 = arith.constant 0 : i32
    %5 = vector.broadcast %c0_i32_0 : i32 to vector<32x1xi32>
    %6 = arith.cmpi ne, %4, %5 : vector<32x1xi32>
    %c0_i32_1 = arith.constant 0 : i32
    %7 = vector.broadcast %c0_i32_1 : i32 to vector<32x1xi32>
    %8 = arith.cmpi slt, %4, %7 : vector<32x1xi32>
    %c0_i32_2 = arith.constant 0 : i32
    %9 = arith.cmpi slt, %2, %c0_i32_2 : i32
    %10 = vector.broadcast %9 : i1 to vector<32x1xi1>
    %11 = vector.broadcast %10 : vector<32x1xi1> to vector<32x1xi1>
    %12 = arith.xori %8, %11 : vector<32x1xi1>
    %13 = arith.andi %12, %6 : vector<32x1xi1>
    %14 = vector.broadcast %2 : i32 to vector<32x1xi32>
    %15 = arith.addi %4, %14 : vector<32x1xi32>
    %16 = arith.select %13, %15, %4 : vector<32x1xi1>, vector<32x1xi32>
    %c0_i32_3 = arith.constant 0 : i32
    %17 = vector.broadcast %c0_i32_3 : i32 to vector<32x1xi32>
    %18 = arith.cmpi sgt, %16, %17 : vector<32x1xi32>
    %c15_i32 = arith.constant 15 : i32
    %19 = vector.broadcast %c15_i32 : i32 to vector<32x1xi32>
    %20 = arith.cmpi slt, %16, %19 : vector<32x1xi32>
    %c0 = arith.constant 0 : index
    %c0_4 = arith.constant 0 : index
    %21 = vector.load %arg0[%c0, %c0_4] : memref<32x64xf32, #tpu.memory_space<vmem>>, vector<32x64xf32>
    %c0_5 = arith.constant 0 : index
    %c0_6 = arith.constant 0 : index
    %22 = vector.load %arg1[%c0_5, %c0_6] : memref<32x96xf32, #tpu.memory_space<vmem>>, vector<32x96xf32>
    %23 = arith.truncf %21 : vector<32x64xf32> to vector<32x64xbf16>
    %c0_7 = arith.constant 0 : index
    %c0_8 = arith.constant 0 : index
    %24 = vector.load %arg2[%c0_7, %c0_8] : memref<64x128xbf16, #tpu.memory_space<vmem>>, vector<64x128xbf16>
    %cst = arith.constant dense<0.000000e+00> : vector<32x128xf32>
    %25 = tpu.matmul %23, %24, %cst {dimension_numbers = #tpu.dot_dimension_numbers<[1], [0], [0], [1], [0, 0, 1, 1], [], []>} : vector<32x64xbf16>, vector<64x128xbf16>, vector<32x128xf32> -> vector<32x128xf32>
    %cst_9 = arith.constant dense<0.000000e+00> : vector<128xf32>
    %26 = vector.multi_reduction <add>, %25, %cst_9 [0] : vector<32x128xf32> to vector<128xf32>
    %27 = vector.shape_cast %26 : vector<128xf32> to vector<1x128xf32>
    %c8_i32 = arith.constant 8 : i32
    %28 = tpu.dynamic_rotate %27 by %c8_i32 dim 1 : vector<1x128xf32>, i32 -> vector<1x128xf32>
    %29 = arith.addf %27, %28 : vector<1x128xf32>
    %c16_i32_10 = arith.constant 16 : i32
    %30 = tpu.dynamic_rotate %29 by %c16_i32_10 dim 1 : vector<1x128xf32>, i32 -> vector<1x128xf32>
    %31 = arith.addf %29, %30 : vector<1x128xf32>
    %c32_i32 = arith.constant 32 : i32
    %32 = tpu.dynamic_rotate %31 by %c32_i32 dim 1 : vector<1x128xf32>, i32 -> vector<1x128xf32>
    %33 = arith.addf %31, %32 : vector<1x128xf32>
    %c64_i32 = arith.constant 64 : i32
    %34 = tpu.dynamic_rotate %33 by %c64_i32 dim 1 : vector<1x128xf32>, i32 -> vector<1x128xf32>
    %35 = arith.addf %33, %34 : vector<1x128xf32>
    %36 = arith.mulf %25, %25 : vector<32x128xf32>
    %cst_11 = arith.constant dense<0.000000e+00> : vector<128xf32>
    %37 = vector.multi_reduction <add>, %36, %cst_11 [0] : vector<32x128xf32> to vector<128xf32>
    %38 = vector.shape_cast %37 : vector<128xf32> to vector<1x128xf32>
    %c8_i32_12 = arith.constant 8 : i32
    %39 = tpu.dynamic_rotate %38 by %c8_i32_12 dim 1 : vector<1x128xf32>, i32 -> vector<1x128xf32>
    %40 = arith.addf %38, %39 : vector<1x128xf32>
    %c16_i32_13 = arith.constant 16 : i32
    %41 = tpu.dynamic_rotate %40 by %c16_i32_13 dim 1 : vector<1x128xf32>, i32 -> vector<1x128xf32>
    %42 = arith.addf %40, %41 : vector<1x128xf32>
    %c32_i32_14 = arith.constant 32 : i32
    %43 = tpu.dynamic_rotate %42 by %c32_i32_14 dim 1 : vector<1x128xf32>, i32 -> vector<1x128xf32>
    %44 = arith.addf %42, %43 : vector<1x128xf32>
    %c64_i32_15 = arith.constant 64 : i32
    %45 = tpu.dynamic_rotate %44 by %c64_i32_15 dim 1 : vector<1x128xf32>, i32 -> vector<1x128xf32>
    %46 = arith.addf %44, %45 : vector<1x128xf32>
    %cst_16 = arith.constant 0.001953125 : f32
    %47 = vector.broadcast %cst_16 : f32 to vector<1x128xf32>
    %48 = arith.mulf %35, %47 : vector<1x128xf32>
    %cst_17 = arith.constant 0.001953125 : f32
    %49 = vector.broadcast %cst_17 : f32 to vector<1x128xf32>
    %50 = arith.mulf %46, %49 : vector<1x128xf32>
    %51 = arith.mulf %48, %48 : vector<1x128xf32>
    %52 = arith.subf %50, %51 : vector<1x128xf32>
    %c0_18 = arith.constant 0 : index
    %c0_19 = arith.constant 0 : index
    %c0_20 = arith.constant 0 : index
    %53 = vector.load %arg8[%c0_18, %c0_19, %c0_20] : memref<6x1x128xf32, #tpu.memory_space<vmem>>, vector<1x1x128xf32>
    %54 = vector.shape_cast %53 : vector<1x1x128xf32> to vector<1x128xf32>
    %cst_21 = arith.constant 9.99999974E-6 : f32
    %55 = vector.broadcast %cst_21 : f32 to vector<1x128xf32>
    %56 = arith.addf %52, %55 : vector<1x128xf32>
    %57 = math.rsqrt %56 : vector<1x128xf32>
    %58 = arith.mulf %54, %57 : vector<1x128xf32>
    %c0_22 = arith.constant 0 : index
    %c0_23 = arith.constant 0 : index
    %c0_24 = arith.constant 0 : index
    %59 = vector.load %arg9[%c0_22, %c0_23, %c0_24] : memref<6x1x128xf32, #tpu.memory_space<vmem>>, vector<1x1x128xf32>
    %60 = vector.shape_cast %59 : vector<1x1x128xf32> to vector<1x128xf32>
    %61 = arith.mulf %48, %58 : vector<1x128xf32>
    %62 = arith.subf %60, %61 : vector<1x128xf32>
    %63 = vector.broadcast %58 : vector<1x128xf32> to vector<32x128xf32>
    %64 = arith.mulf %25, %63 : vector<32x128xf32>
    %65 = vector.broadcast %62 : vector<1x128xf32> to vector<32x128xf32>
    %66 = arith.addf %64, %65 : vector<32x128xf32>
    %cst_25 = arith.constant 0.000000e+00 : f32
    %67 = vector.broadcast %cst_25 : f32 to vector<32x128xf32>
    %68 = arith.maximumf %66, %67 : vector<32x128xf32>
    %cst_26 = arith.constant 0.000000e+00 : f32
    %69 = vector.broadcast %cst_26 : f32 to vector<1x64xf32>
    %70 = arith.truncf %21 : vector<32x64xf32> to vector<32x64xbf16>
    %71 = vector.extract_strided_slice %21 {offsets = [0, 0], sizes = [31, 64], strides = [1, 1]} : vector<32x64xf32> to vector<31x64xf32>
    %72 = tpu.concatenate %69, %71 in 0 : vector<1x64xf32>, vector<31x64xf32> -> vector<32x64xf32>
    %cst_27 = arith.constant 0.000000e+00 : f32
    %73 = vector.shape_cast %18 : vector<32x1xi1> to vector<32x1xi1>
    %74 = vector.broadcast %73 : vector<32x1xi1> to vector<32x64xi1>
    %75 = vector.broadcast %cst_27 : f32 to vector<32x64xf32>
    %76 = arith.select %74, %72, %75 : vector<32x64xi1>, vector<32x64xf32>
    %77 = arith.truncf %76 : vector<32x64xf32> to vector<32x64xbf16>
    %78 = vector.extract_strided_slice %21 {offsets = [1, 0], sizes = [31, 64], strides = [1, 1]} : vector<32x64xf32> to vector<31x64xf32>
    %79 = tpu.concatenate %78, %69 in 0 : vector<31x64xf32>, vector<1x64xf32> -> vector<32x64xf32>
    %cst_28 = arith.constant 0.000000e+00 : f32
    %80 = vector.shape_cast %20 : vector<32x1xi1> to vector<32x1xi1>
    %81 = vector.broadcast %80 : vector<32x1xi1> to vector<32x64xi1>
    %82 = vector.broadcast %cst_28 : f32 to vector<32x64xf32>
    %83 = arith.select %81, %79, %82 : vector<32x64xi1>, vector<32x64xf32>
    %84 = arith.truncf %83 : vector<32x64xf32> to vector<32x64xbf16>
    %c0_29 = arith.constant 0 : index
    %c0_30 = arith.constant 0 : index
    %c0_31 = arith.constant 0 : index
    %85 = vector.load %arg4[%c0_29, %c0_30, %c0_31] : memref<3x64x128xbf16, #tpu.memory_space<vmem>>, vector<1x64x128xbf16>
    %86 = vector.shape_cast %85 : vector<1x64x128xbf16> to vector<64x128xbf16>
    %cst_32 = arith.constant dense<0.000000e+00> : vector<32x128xf32>
    %87 = tpu.matmul %77, %86, %cst_32 {dimension_numbers = #tpu.dot_dimension_numbers<[1], [0], [0], [1], [0, 0, 1, 1], [], []>} : vector<32x64xbf16>, vector<64x128xbf16>, vector<32x128xf32> -> vector<32x128xf32>
    %c1 = arith.constant 1 : index
    %c0_33 = arith.constant 0 : index
    %c0_34 = arith.constant 0 : index
    %88 = vector.load %arg4[%c1, %c0_33, %c0_34] : memref<3x64x128xbf16, #tpu.memory_space<vmem>>, vector<1x64x128xbf16>
    %89 = vector.shape_cast %88 : vector<1x64x128xbf16> to vector<64x128xbf16>
    %cst_35 = arith.constant dense<0.000000e+00> : vector<32x128xf32>
    %90 = tpu.matmul %70, %89, %cst_35 {dimension_numbers = #tpu.dot_dimension_numbers<[1], [0], [0], [1], [0, 0, 1, 1], [], []>} : vector<32x64xbf16>, vector<64x128xbf16>, vector<32x128xf32> -> vector<32x128xf32>
    %91 = arith.addf %87, %90 : vector<32x128xf32>
    %c2 = arith.constant 2 : index
    %c0_36 = arith.constant 0 : index
    %c0_37 = arith.constant 0 : index
    %92 = vector.load %arg4[%c2, %c0_36, %c0_37] : memref<3x64x128xbf16, #tpu.memory_space<vmem>>, vector<1x64x128xbf16>
    %93 = vector.shape_cast %92 : vector<1x64x128xbf16> to vector<64x128xbf16>
    %cst_38 = arith.constant dense<0.000000e+00> : vector<32x128xf32>
    %94 = tpu.matmul %84, %93, %cst_38 {dimension_numbers = #tpu.dot_dimension_numbers<[1], [0], [0], [1], [0, 0, 1, 1], [], []>} : vector<32x64xbf16>, vector<64x128xbf16>, vector<32x128xf32> -> vector<32x128xf32>
    %95 = arith.addf %91, %94 : vector<32x128xf32>
    %cst_39 = arith.constant dense<0.000000e+00> : vector<128xf32>
    %96 = vector.multi_reduction <add>, %95, %cst_39 [0] : vector<32x128xf32> to vector<128xf32>
    %97 = vector.shape_cast %96 : vector<128xf32> to vector<1x128xf32>
    %c8_i32_40 = arith.constant 8 : i32
    %98 = tpu.dynamic_rotate %97 by %c8_i32_40 dim 1 : vector<1x128xf32>, i32 -> vector<1x128xf32>
    %99 = arith.addf %97, %98 : vector<1x128xf32>
    %c16_i32_41 = arith.constant 16 : i32
    %100 = tpu.dynamic_rotate %99 by %c16_i32_41 dim 1 : vector<1x128xf32>, i32 -> vector<1x128xf32>
    %101 = arith.addf %99, %100 : vector<1x128xf32>
    %c32_i32_42 = arith.constant 32 : i32
    %102 = tpu.dynamic_rotate %101 by %c32_i32_42 dim 1 : vector<1x128xf32>, i32 -> vector<1x128xf32>
    %103 = arith.addf %101, %102 : vector<1x128xf32>
    %c64_i32_43 = arith.constant 64 : i32
    %104 = tpu.dynamic_rotate %103 by %c64_i32_43 dim 1 : vector<1x128xf32>, i32 -> vector<1x128xf32>
    %105 = arith.addf %103, %104 : vector<1x128xf32>
    %106 = arith.mulf %95, %95 : vector<32x128xf32>
    %cst_44 = arith.constant dense<0.000000e+00> : vector<128xf32>
    %107 = vector.multi_reduction <add>, %106, %cst_44 [0] : vector<32x128xf32> to vector<128xf32>
    %108 = vector.shape_cast %107 : vector<128xf32> to vector<1x128xf32>
    %c8_i32_45 = arith.constant 8 : i32
    %109 = tpu.dynamic_rotate %108 by %c8_i32_45 dim 1 : vector<1x128xf32>, i32 -> vector<1x128xf32>
    %110 = arith.addf %108, %109 : vector<1x128xf32>
    %c16_i32_46 = arith.constant 16 : i32
    %111 = tpu.dynamic_rotate %110 by %c16_i32_46 dim 1 : vector<1x128xf32>, i32 -> vector<1x128xf32>
    %112 = arith.addf %110, %111 : vector<1x128xf32>
    %c32_i32_47 = arith.constant 32 : i32
    %113 = tpu.dynamic_rotate %112 by %c32_i32_47 dim 1 : vector<1x128xf32>, i32 -> vector<1x128xf32>
    %114 = arith.addf %112, %113 : vector<1x128xf32>
    %c64_i32_48 = arith.constant 64 : i32
    %115 = tpu.dynamic_rotate %114 by %c64_i32_48 dim 1 : vector<1x128xf32>, i32 -> vector<1x128xf32>
    %116 = arith.addf %114, %115 : vector<1x128xf32>
    %cst_49 = arith.constant 0.001953125 : f32
    %117 = vector.broadcast %cst_49 : f32 to vector<1x128xf32>
    %118 = arith.mulf %105, %117 : vector<1x128xf32>
    %cst_50 = arith.constant 0.001953125 : f32
    %119 = vector.broadcast %cst_50 : f32 to vector<1x128xf32>
    %120 = arith.mulf %116, %119 : vector<1x128xf32>
    %121 = arith.mulf %118, %118 : vector<1x128xf32>
    %122 = arith.subf %120, %121 : vector<1x128xf32>
    %c2_51 = arith.constant 2 : index
    %c0_52 = arith.constant 0 : index
    %c0_53 = arith.constant 0 : index
    %123 = vector.load %arg8[%c2_51, %c0_52, %c0_53] : memref<6x1x128xf32, #tpu.memory_space<vmem>>, vector<1x1x128xf32>
    %124 = vector.shape_cast %123 : vector<1x1x128xf32> to vector<1x128xf32>
    %cst_54 = arith.constant 9.99999974E-6 : f32
    %125 = vector.broadcast %cst_54 : f32 to vector<1x128xf32>
    %126 = arith.addf %122, %125 : vector<1x128xf32>
    %127 = math.rsqrt %126 : vector<1x128xf32>
    %128 = arith.mulf %124, %127 : vector<1x128xf32>
    %c2_55 = arith.constant 2 : index
    %c0_56 = arith.constant 0 : index
    %c0_57 = arith.constant 0 : index
    %129 = vector.load %arg9[%c2_55, %c0_56, %c0_57] : memref<6x1x128xf32, #tpu.memory_space<vmem>>, vector<1x1x128xf32>
    %130 = vector.shape_cast %129 : vector<1x1x128xf32> to vector<1x128xf32>
    %131 = arith.mulf %118, %128 : vector<1x128xf32>
    %132 = arith.subf %130, %131 : vector<1x128xf32>
    %133 = vector.broadcast %128 : vector<1x128xf32> to vector<32x128xf32>
    %134 = arith.mulf %95, %133 : vector<32x128xf32>
    %135 = vector.broadcast %132 : vector<1x128xf32> to vector<32x128xf32>
    %136 = arith.addf %134, %135 : vector<32x128xf32>
    %cst_58 = arith.constant 0.000000e+00 : f32
    %137 = vector.broadcast %cst_58 : f32 to vector<32x128xf32>
    %138 = arith.maximumf %136, %137 : vector<32x128xf32>
    %139 = arith.truncf %22 : vector<32x96xf32> to vector<32x96xbf16>
    %c0_59 = arith.constant 0 : index
    %c0_60 = arith.constant 0 : index
    %140 = vector.load %arg3[%c0_59, %c0_60] : memref<96x128xbf16, #tpu.memory_space<vmem>>, vector<96x128xbf16>
    %cst_61 = arith.constant dense<0.000000e+00> : vector<32x128xf32>
    %141 = tpu.matmul %139, %140, %cst_61 {dimension_numbers = #tpu.dot_dimension_numbers<[1], [0], [0], [1], [0, 0, 1, 1], [], []>} : vector<32x96xbf16>, vector<96x128xbf16>, vector<32x128xf32> -> vector<32x128xf32>
    %cst_62 = arith.constant dense<0.000000e+00> : vector<128xf32>
    %142 = vector.multi_reduction <add>, %141, %cst_62 [0] : vector<32x128xf32> to vector<128xf32>
    %143 = vector.shape_cast %142 : vector<128xf32> to vector<1x128xf32>
    %c8_i32_63 = arith.constant 8 : i32
    %144 = tpu.dynamic_rotate %143 by %c8_i32_63 dim 1 : vector<1x128xf32>, i32 -> vector<1x128xf32>
    %145 = arith.addf %143, %144 : vector<1x128xf32>
    %c16_i32_64 = arith.constant 16 : i32
    %146 = tpu.dynamic_rotate %145 by %c16_i32_64 dim 1 : vector<1x128xf32>, i32 -> vector<1x128xf32>
    %147 = arith.addf %145, %146 : vector<1x128xf32>
    %c32_i32_65 = arith.constant 32 : i32
    %148 = tpu.dynamic_rotate %147 by %c32_i32_65 dim 1 : vector<1x128xf32>, i32 -> vector<1x128xf32>
    %149 = arith.addf %147, %148 : vector<1x128xf32>
    %c64_i32_66 = arith.constant 64 : i32
    %150 = tpu.dynamic_rotate %149 by %c64_i32_66 dim 1 : vector<1x128xf32>, i32 -> vector<1x128xf32>
    %151 = arith.addf %149, %150 : vector<1x128xf32>
    %152 = arith.mulf %141, %141 : vector<32x128xf32>
    %cst_67 = arith.constant dense<0.000000e+00> : vector<128xf32>
    %153 = vector.multi_reduction <add>, %152, %cst_67 [0] : vector<32x128xf32> to vector<128xf32>
    %154 = vector.shape_cast %153 : vector<128xf32> to vector<1x128xf32>
    %c8_i32_68 = arith.constant 8 : i32
    %155 = tpu.dynamic_rotate %154 by %c8_i32_68 dim 1 : vector<1x128xf32>, i32 -> vector<1x128xf32>
    %156 = arith.addf %154, %155 : vector<1x128xf32>
    %c16_i32_69 = arith.constant 16 : i32
    %157 = tpu.dynamic_rotate %156 by %c16_i32_69 dim 1 : vector<1x128xf32>, i32 -> vector<1x128xf32>
    %158 = arith.addf %156, %157 : vector<1x128xf32>
    %c32_i32_70 = arith.constant 32 : i32
    %159 = tpu.dynamic_rotate %158 by %c32_i32_70 dim 1 : vector<1x128xf32>, i32 -> vector<1x128xf32>
    %160 = arith.addf %158, %159 : vector<1x128xf32>
    %c64_i32_71 = arith.constant 64 : i32
    %161 = tpu.dynamic_rotate %160 by %c64_i32_71 dim 1 : vector<1x128xf32>, i32 -> vector<1x128xf32>
    %162 = arith.addf %160, %161 : vector<1x128xf32>
    %cst_72 = arith.constant 0.001953125 : f32
    %163 = vector.broadcast %cst_72 : f32 to vector<1x128xf32>
    %164 = arith.mulf %151, %163 : vector<1x128xf32>
    %cst_73 = arith.constant 0.001953125 : f32
    %165 = vector.broadcast %cst_73 : f32 to vector<1x128xf32>
    %166 = arith.mulf %162, %165 : vector<1x128xf32>
    %167 = arith.mulf %164, %164 : vector<1x128xf32>
    %168 = arith.subf %166, %167 : vector<1x128xf32>
    %c1_74 = arith.constant 1 : index
    %c0_75 = arith.constant 0 : index
    %c0_76 = arith.constant 0 : index
    %169 = vector.load %arg8[%c1_74, %c0_75, %c0_76] : memref<6x1x128xf32, #tpu.memory_space<vmem>>, vector<1x1x128xf32>
    %170 = vector.shape_cast %169 : vector<1x1x128xf32> to vector<1x128xf32>
    %cst_77 = arith.constant 9.99999974E-6 : f32
    %171 = vector.broadcast %cst_77 : f32 to vector<1x128xf32>
    %172 = arith.addf %168, %171 : vector<1x128xf32>
    %173 = math.rsqrt %172 : vector<1x128xf32>
    %174 = arith.mulf %170, %173 : vector<1x128xf32>
    %c1_78 = arith.constant 1 : index
    %c0_79 = arith.constant 0 : index
    %c0_80 = arith.constant 0 : index
    %175 = vector.load %arg9[%c1_78, %c0_79, %c0_80] : memref<6x1x128xf32, #tpu.memory_space<vmem>>, vector<1x1x128xf32>
    %176 = vector.shape_cast %175 : vector<1x1x128xf32> to vector<1x128xf32>
    %177 = arith.mulf %164, %174 : vector<1x128xf32>
    %178 = arith.subf %176, %177 : vector<1x128xf32>
    %179 = vector.broadcast %174 : vector<1x128xf32> to vector<32x128xf32>
    %180 = arith.mulf %141, %179 : vector<32x128xf32>
    %181 = vector.broadcast %178 : vector<1x128xf32> to vector<32x128xf32>
    %182 = arith.addf %180, %181 : vector<32x128xf32>
    %cst_81 = arith.constant 0.000000e+00 : f32
    %183 = vector.broadcast %cst_81 : f32 to vector<32x128xf32>
    %184 = arith.maximumf %182, %183 : vector<32x128xf32>
    %185 = arith.addf %138, %184 : vector<32x128xf32>
    %cst_82 = arith.constant 0.000000e+00 : f32
    %186 = vector.broadcast %cst_82 : f32 to vector<1x128xf32>
    %187 = arith.truncf %185 : vector<32x128xf32> to vector<32x128xbf16>
    %188 = vector.extract_strided_slice %185 {offsets = [0, 0], sizes = [31, 128], strides = [1, 1]} : vector<32x128xf32> to vector<31x128xf32>
    %189 = tpu.concatenate %186, %188 in 0 : vector<1x128xf32>, vector<31x128xf32> -> vector<32x128xf32>
    %cst_83 = arith.constant 0.000000e+00 : f32
    %190 = vector.shape_cast %18 : vector<32x1xi1> to vector<32x1xi1>
    %191 = vector.broadcast %190 : vector<32x1xi1> to vector<32x128xi1>
    %192 = vector.broadcast %cst_83 : f32 to vector<32x128xf32>
    %193 = arith.select %191, %189, %192 : vector<32x128xi1>, vector<32x128xf32>
    %194 = arith.truncf %193 : vector<32x128xf32> to vector<32x128xbf16>
    %195 = vector.extract_strided_slice %185 {offsets = [1, 0], sizes = [31, 128], strides = [1, 1]} : vector<32x128xf32> to vector<31x128xf32>
    %196 = tpu.concatenate %195, %186 in 0 : vector<31x128xf32>, vector<1x128xf32> -> vector<32x128xf32>
    %cst_84 = arith.constant 0.000000e+00 : f32
    %197 = vector.shape_cast %20 : vector<32x1xi1> to vector<32x1xi1>
    %198 = vector.broadcast %197 : vector<32x1xi1> to vector<32x128xi1>
    %199 = vector.broadcast %cst_84 : f32 to vector<32x128xf32>
    %200 = arith.select %198, %196, %199 : vector<32x128xi1>, vector<32x128xf32>
    %201 = arith.truncf %200 : vector<32x128xf32> to vector<32x128xbf16>
    %c0_85 = arith.constant 0 : index
    %c0_86 = arith.constant 0 : index
    %c0_87 = arith.constant 0 : index
    %202 = vector.load %arg5[%c0_85, %c0_86, %c0_87] : memref<3x128x128xbf16, #tpu.memory_space<vmem>>, vector<1x128x128xbf16>
    %203 = vector.shape_cast %202 : vector<1x128x128xbf16> to vector<128x128xbf16>
    %cst_88 = arith.constant dense<0.000000e+00> : vector<32x128xf32>
    %204 = tpu.matmul %194, %203, %cst_88 {dimension_numbers = #tpu.dot_dimension_numbers<[1], [0], [0], [1], [0, 0, 1, 1], [], []>} : vector<32x128xbf16>, vector<128x128xbf16>, vector<32x128xf32> -> vector<32x128xf32>
    %c1_89 = arith.constant 1 : index
    %c0_90 = arith.constant 0 : index
    %c0_91 = arith.constant 0 : index
    %205 = vector.load %arg5[%c1_89, %c0_90, %c0_91] : memref<3x128x128xbf16, #tpu.memory_space<vmem>>, vector<1x128x128xbf16>
    %206 = vector.shape_cast %205 : vector<1x128x128xbf16> to vector<128x128xbf16>
    %cst_92 = arith.constant dense<0.000000e+00> : vector<32x128xf32>
    %207 = tpu.matmul %187, %206, %cst_92 {dimension_numbers = #tpu.dot_dimension_numbers<[1], [0], [0], [1], [0, 0, 1, 1], [], []>} : vector<32x128xbf16>, vector<128x128xbf16>, vector<32x128xf32> -> vector<32x128xf32>
    %208 = arith.addf %204, %207 : vector<32x128xf32>
    %c2_93 = arith.constant 2 : index
    %c0_94 = arith.constant 0 : index
    %c0_95 = arith.constant 0 : index
    %209 = vector.load %arg5[%c2_93, %c0_94, %c0_95] : memref<3x128x128xbf16, #tpu.memory_space<vmem>>, vector<1x128x128xbf16>
    %210 = vector.shape_cast %209 : vector<1x128x128xbf16> to vector<128x128xbf16>
    %cst_96 = arith.constant dense<0.000000e+00> : vector<32x128xf32>
    %211 = tpu.matmul %201, %210, %cst_96 {dimension_numbers = #tpu.dot_dimension_numbers<[1], [0], [0], [1], [0, 0, 1, 1], [], []>} : vector<32x128xbf16>, vector<128x128xbf16>, vector<32x128xf32> -> vector<32x128xf32>
    %212 = arith.addf %208, %211 : vector<32x128xf32>
    %cst_97 = arith.constant dense<0.000000e+00> : vector<128xf32>
    %213 = vector.multi_reduction <add>, %212, %cst_97 [0] : vector<32x128xf32> to vector<128xf32>
    %214 = vector.shape_cast %213 : vector<128xf32> to vector<1x128xf32>
    %c8_i32_98 = arith.constant 8 : i32
    %215 = tpu.dynamic_rotate %214 by %c8_i32_98 dim 1 : vector<1x128xf32>, i32 -> vector<1x128xf32>
    %216 = arith.addf %214, %215 : vector<1x128xf32>
    %c16_i32_99 = arith.constant 16 : i32
    %217 = tpu.dynamic_rotate %216 by %c16_i32_99 dim 1 : vector<1x128xf32>, i32 -> vector<1x128xf32>
    %218 = arith.addf %216, %217 : vector<1x128xf32>
    %c32_i32_100 = arith.constant 32 : i32
    %219 = tpu.dynamic_rotate %218 by %c32_i32_100 dim 1 : vector<1x128xf32>, i32 -> vector<1x128xf32>
    %220 = arith.addf %218, %219 : vector<1x128xf32>
    %c64_i32_101 = arith.constant 64 : i32
    %221 = tpu.dynamic_rotate %220 by %c64_i32_101 dim 1 : vector<1x128xf32>, i32 -> vector<1x128xf32>
    %222 = arith.addf %220, %221 : vector<1x128xf32>
    %223 = arith.mulf %212, %212 : vector<32x128xf32>
    %cst_102 = arith.constant dense<0.000000e+00> : vector<128xf32>
    %224 = vector.multi_reduction <add>, %223, %cst_102 [0] : vector<32x128xf32> to vector<128xf32>
    %225 = vector.shape_cast %224 : vector<128xf32> to vector<1x128xf32>
    %c8_i32_103 = arith.constant 8 : i32
    %226 = tpu.dynamic_rotate %225 by %c8_i32_103 dim 1 : vector<1x128xf32>, i32 -> vector<1x128xf32>
    %227 = arith.addf %225, %226 : vector<1x128xf32>
    %c16_i32_104 = arith.constant 16 : i32
    %228 = tpu.dynamic_rotate %227 by %c16_i32_104 dim 1 : vector<1x128xf32>, i32 -> vector<1x128xf32>
    %229 = arith.addf %227, %228 : vector<1x128xf32>
    %c32_i32_105 = arith.constant 32 : i32
    %230 = tpu.dynamic_rotate %229 by %c32_i32_105 dim 1 : vector<1x128xf32>, i32 -> vector<1x128xf32>
    %231 = arith.addf %229, %230 : vector<1x128xf32>
    %c64_i32_106 = arith.constant 64 : i32
    %232 = tpu.dynamic_rotate %231 by %c64_i32_106 dim 1 : vector<1x128xf32>, i32 -> vector<1x128xf32>
    %233 = arith.addf %231, %232 : vector<1x128xf32>
    %cst_107 = arith.constant 0.001953125 : f32
    %234 = vector.broadcast %cst_107 : f32 to vector<1x128xf32>
    %235 = arith.mulf %222, %234 : vector<1x128xf32>
    %cst_108 = arith.constant 0.001953125 : f32
    %236 = vector.broadcast %cst_108 : f32 to vector<1x128xf32>
    %237 = arith.mulf %233, %236 : vector<1x128xf32>
    %238 = arith.mulf %235, %235 : vector<1x128xf32>
    %239 = arith.subf %237, %238 : vector<1x128xf32>
    %c3 = arith.constant 3 : index
    %c0_109 = arith.constant 0 : index
    %c0_110 = arith.constant 0 : index
    %240 = vector.load %arg8[%c3, %c0_109, %c0_110] : memref<6x1x128xf32, #tpu.memory_space<vmem>>, vector<1x1x128xf32>
    %241 = vector.shape_cast %240 : vector<1x1x128xf32> to vector<1x128xf32>
    %cst_111 = arith.constant 9.99999974E-6 : f32
    %242 = vector.broadcast %cst_111 : f32 to vector<1x128xf32>
    %243 = arith.addf %239, %242 : vector<1x128xf32>
    %244 = math.rsqrt %243 : vector<1x128xf32>
    %245 = arith.mulf %241, %244 : vector<1x128xf32>
    %c3_112 = arith.constant 3 : index
    %c0_113 = arith.constant 0 : index
    %c0_114 = arith.constant 0 : index
    %246 = vector.load %arg9[%c3_112, %c0_113, %c0_114] : memref<6x1x128xf32, #tpu.memory_space<vmem>>, vector<1x1x128xf32>
    %247 = vector.shape_cast %246 : vector<1x1x128xf32> to vector<1x128xf32>
    %248 = arith.mulf %235, %245 : vector<1x128xf32>
    %249 = arith.subf %247, %248 : vector<1x128xf32>
    %250 = vector.broadcast %245 : vector<1x128xf32> to vector<32x128xf32>
    %251 = arith.mulf %212, %250 : vector<32x128xf32>
    %252 = vector.broadcast %249 : vector<1x128xf32> to vector<32x128xf32>
    %253 = arith.addf %251, %252 : vector<32x128xf32>
    %cst_115 = arith.constant 0.000000e+00 : f32
    %254 = vector.broadcast %cst_115 : f32 to vector<32x128xf32>
    %255 = arith.maximumf %253, %254 : vector<32x128xf32>
    %256 = arith.addf %68, %255 : vector<32x128xf32>
    %cst_116 = arith.constant 0.000000e+00 : f32
    %257 = vector.broadcast %cst_116 : f32 to vector<1x128xf32>
    %258 = arith.truncf %256 : vector<32x128xf32> to vector<32x128xbf16>
    %259 = vector.extract_strided_slice %256 {offsets = [0, 0], sizes = [31, 128], strides = [1, 1]} : vector<32x128xf32> to vector<31x128xf32>
    %260 = tpu.concatenate %257, %259 in 0 : vector<1x128xf32>, vector<31x128xf32> -> vector<32x128xf32>
    %cst_117 = arith.constant 0.000000e+00 : f32
    %261 = vector.shape_cast %18 : vector<32x1xi1> to vector<32x1xi1>
    %262 = vector.broadcast %261 : vector<32x1xi1> to vector<32x128xi1>
    %263 = vector.broadcast %cst_117 : f32 to vector<32x128xf32>
    %264 = arith.select %262, %260, %263 : vector<32x128xi1>, vector<32x128xf32>
    %265 = arith.truncf %264 : vector<32x128xf32> to vector<32x128xbf16>
    %266 = vector.extract_strided_slice %256 {offsets = [1, 0], sizes = [31, 128], strides = [1, 1]} : vector<32x128xf32> to vector<31x128xf32>
    %267 = tpu.concatenate %266, %257 in 0 : vector<31x128xf32>, vector<1x128xf32> -> vector<32x128xf32>
    %cst_118 = arith.constant 0.000000e+00 : f32
    %268 = vector.shape_cast %20 : vector<32x1xi1> to vector<32x1xi1>
    %269 = vector.broadcast %268 : vector<32x1xi1> to vector<32x128xi1>
    %270 = vector.broadcast %cst_118 : f32 to vector<32x128xf32>
    %271 = arith.select %269, %267, %270 : vector<32x128xi1>, vector<32x128xf32>
    %272 = arith.truncf %271 : vector<32x128xf32> to vector<32x128xbf16>
    %c0_119 = arith.constant 0 : index
    %c0_120 = arith.constant 0 : index
    %c0_121 = arith.constant 0 : index
    %273 = vector.load %arg6[%c0_119, %c0_120, %c0_121] : memref<3x128x128xbf16, #tpu.memory_space<vmem>>, vector<1x128x128xbf16>
    %274 = vector.shape_cast %273 : vector<1x128x128xbf16> to vector<128x128xbf16>
    %cst_122 = arith.constant dense<0.000000e+00> : vector<32x128xf32>
    %275 = tpu.matmul %265, %274, %cst_122 {dimension_numbers = #tpu.dot_dimension_numbers<[1], [0], [0], [1], [0, 0, 1, 1], [], []>} : vector<32x128xbf16>, vector<128x128xbf16>, vector<32x128xf32> -> vector<32x128xf32>
    %c1_123 = arith.constant 1 : index
    %c0_124 = arith.constant 0 : index
    %c0_125 = arith.constant 0 : index
    %276 = vector.load %arg6[%c1_123, %c0_124, %c0_125] : memref<3x128x128xbf16, #tpu.memory_space<vmem>>, vector<1x128x128xbf16>
    %277 = vector.shape_cast %276 : vector<1x128x128xbf16> to vector<128x128xbf16>
    %cst_126 = arith.constant dense<0.000000e+00> : vector<32x128xf32>
    %278 = tpu.matmul %258, %277, %cst_126 {dimension_numbers = #tpu.dot_dimension_numbers<[1], [0], [0], [1], [0, 0, 1, 1], [], []>} : vector<32x128xbf16>, vector<128x128xbf16>, vector<32x128xf32> -> vector<32x128xf32>
    %279 = arith.addf %275, %278 : vector<32x128xf32>
    %c2_127 = arith.constant 2 : index
    %c0_128 = arith.constant 0 : index
    %c0_129 = arith.constant 0 : index
    %280 = vector.load %arg6[%c2_127, %c0_128, %c0_129] : memref<3x128x128xbf16, #tpu.memory_space<vmem>>, vector<1x128x128xbf16>
    %281 = vector.shape_cast %280 : vector<1x128x128xbf16> to vector<128x128xbf16>
    %cst_130 = arith.constant dense<0.000000e+00> : vector<32x128xf32>
    %282 = tpu.matmul %272, %281, %cst_130 {dimension_numbers = #tpu.dot_dimension_numbers<[1], [0], [0], [1], [0, 0, 1, 1], [], []>} : vector<32x128xbf16>, vector<128x128xbf16>, vector<32x128xf32> -> vector<32x128xf32>
    %283 = arith.addf %279, %282 : vector<32x128xf32>
    %cst_131 = arith.constant dense<0.000000e+00> : vector<128xf32>
    %284 = vector.multi_reduction <add>, %283, %cst_131 [0] : vector<32x128xf32> to vector<128xf32>
    %285 = vector.shape_cast %284 : vector<128xf32> to vector<1x128xf32>
    %c8_i32_132 = arith.constant 8 : i32
    %286 = tpu.dynamic_rotate %285 by %c8_i32_132 dim 1 : vector<1x128xf32>, i32 -> vector<1x128xf32>
    %287 = arith.addf %285, %286 : vector<1x128xf32>
    %c16_i32_133 = arith.constant 16 : i32
    %288 = tpu.dynamic_rotate %287 by %c16_i32_133 dim 1 : vector<1x128xf32>, i32 -> vector<1x128xf32>
    %289 = arith.addf %287, %288 : vector<1x128xf32>
    %c32_i32_134 = arith.constant 32 : i32
    %290 = tpu.dynamic_rotate %289 by %c32_i32_134 dim 1 : vector<1x128xf32>, i32 -> vector<1x128xf32>
    %291 = arith.addf %289, %290 : vector<1x128xf32>
    %c64_i32_135 = arith.constant 64 : i32
    %292 = tpu.dynamic_rotate %291 by %c64_i32_135 dim 1 : vector<1x128xf32>, i32 -> vector<1x128xf32>
    %293 = arith.addf %291, %292 : vector<1x128xf32>
    %294 = arith.mulf %283, %283 : vector<32x128xf32>
    %cst_136 = arith.constant dense<0.000000e+00> : vector<128xf32>
    %295 = vector.multi_reduction <add>, %294, %cst_136 [0] : vector<32x128xf32> to vector<128xf32>
    %296 = vector.shape_cast %295 : vector<128xf32> to vector<1x128xf32>
    %c8_i32_137 = arith.constant 8 : i32
    %297 = tpu.dynamic_rotate %296 by %c8_i32_137 dim 1 : vector<1x128xf32>, i32 -> vector<1x128xf32>
    %298 = arith.addf %296, %297 : vector<1x128xf32>
    %c16_i32_138 = arith.constant 16 : i32
    %299 = tpu.dynamic_rotate %298 by %c16_i32_138 dim 1 : vector<1x128xf32>, i32 -> vector<1x128xf32>
    %300 = arith.addf %298, %299 : vector<1x128xf32>
    %c32_i32_139 = arith.constant 32 : i32
    %301 = tpu.dynamic_rotate %300 by %c32_i32_139 dim 1 : vector<1x128xf32>, i32 -> vector<1x128xf32>
    %302 = arith.addf %300, %301 : vector<1x128xf32>
    %c64_i32_140 = arith.constant 64 : i32
    %303 = tpu.dynamic_rotate %302 by %c64_i32_140 dim 1 : vector<1x128xf32>, i32 -> vector<1x128xf32>
    %304 = arith.addf %302, %303 : vector<1x128xf32>
    %cst_141 = arith.constant 0.001953125 : f32
    %305 = vector.broadcast %cst_141 : f32 to vector<1x128xf32>
    %306 = arith.mulf %293, %305 : vector<1x128xf32>
    %cst_142 = arith.constant 0.001953125 : f32
    %307 = vector.broadcast %cst_142 : f32 to vector<1x128xf32>
    %308 = arith.mulf %304, %307 : vector<1x128xf32>
    %309 = arith.mulf %306, %306 : vector<1x128xf32>
    %310 = arith.subf %308, %309 : vector<1x128xf32>
    %c4 = arith.constant 4 : index
    %c0_143 = arith.constant 0 : index
    %c0_144 = arith.constant 0 : index
    %311 = vector.load %arg8[%c4, %c0_143, %c0_144] : memref<6x1x128xf32, #tpu.memory_space<vmem>>, vector<1x1x128xf32>
    %312 = vector.shape_cast %311 : vector<1x1x128xf32> to vector<1x128xf32>
    %cst_145 = arith.constant 9.99999974E-6 : f32
    %313 = vector.broadcast %cst_145 : f32 to vector<1x128xf32>
    %314 = arith.addf %310, %313 : vector<1x128xf32>
    %315 = math.rsqrt %314 : vector<1x128xf32>
    %316 = arith.mulf %312, %315 : vector<1x128xf32>
    %c4_146 = arith.constant 4 : index
    %c0_147 = arith.constant 0 : index
    %c0_148 = arith.constant 0 : index
    %317 = vector.load %arg9[%c4_146, %c0_147, %c0_148] : memref<6x1x128xf32, #tpu.memory_space<vmem>>, vector<1x1x128xf32>
    %318 = vector.shape_cast %317 : vector<1x1x128xf32> to vector<1x128xf32>
    %319 = arith.mulf %306, %316 : vector<1x128xf32>
    %320 = arith.subf %318, %319 : vector<1x128xf32>
    %321 = vector.broadcast %316 : vector<1x128xf32> to vector<32x128xf32>
    %322 = arith.mulf %283, %321 : vector<32x128xf32>
    %323 = vector.broadcast %320 : vector<1x128xf32> to vector<32x128xf32>
    %324 = arith.addf %322, %323 : vector<32x128xf32>
    %cst_149 = arith.constant 0.000000e+00 : f32
    %325 = vector.broadcast %cst_149 : f32 to vector<32x128xf32>
    %326 = arith.maximumf %324, %325 : vector<32x128xf32>
    %cst_150 = arith.constant 0.000000e+00 : f32
    %327 = vector.broadcast %cst_150 : f32 to vector<1x128xf32>
    %328 = arith.truncf %326 : vector<32x128xf32> to vector<32x128xbf16>
    %329 = vector.extract_strided_slice %326 {offsets = [0, 0], sizes = [31, 128], strides = [1, 1]} : vector<32x128xf32> to vector<31x128xf32>
    %330 = tpu.concatenate %327, %329 in 0 : vector<1x128xf32>, vector<31x128xf32> -> vector<32x128xf32>
    %cst_151 = arith.constant 0.000000e+00 : f32
    %331 = vector.shape_cast %18 : vector<32x1xi1> to vector<32x1xi1>
    %332 = vector.broadcast %331 : vector<32x1xi1> to vector<32x128xi1>
    %333 = vector.broadcast %cst_151 : f32 to vector<32x128xf32>
    %334 = arith.select %332, %330, %333 : vector<32x128xi1>, vector<32x128xf32>
    %335 = arith.truncf %334 : vector<32x128xf32> to vector<32x128xbf16>
    %336 = vector.extract_strided_slice %326 {offsets = [1, 0], sizes = [31, 128], strides = [1, 1]} : vector<32x128xf32> to vector<31x128xf32>
    %337 = tpu.concatenate %336, %327 in 0 : vector<31x128xf32>, vector<1x128xf32> -> vector<32x128xf32>
    %cst_152 = arith.constant 0.000000e+00 : f32
    %338 = vector.shape_cast %20 : vector<32x1xi1> to vector<32x1xi1>
    %339 = vector.broadcast %338 : vector<32x1xi1> to vector<32x128xi1>
    %340 = vector.broadcast %cst_152 : f32 to vector<32x128xf32>
    %341 = arith.select %339, %337, %340 : vector<32x128xi1>, vector<32x128xf32>
    %342 = arith.truncf %341 : vector<32x128xf32> to vector<32x128xbf16>
    %c0_153 = arith.constant 0 : index
    %c0_154 = arith.constant 0 : index
    %c0_155 = arith.constant 0 : index
    %343 = vector.load %arg7[%c0_153, %c0_154, %c0_155] : memref<3x128x128xbf16, #tpu.memory_space<vmem>>, vector<1x128x128xbf16>
    %344 = vector.shape_cast %343 : vector<1x128x128xbf16> to vector<128x128xbf16>
    %cst_156 = arith.constant dense<0.000000e+00> : vector<32x128xf32>
    %345 = tpu.matmul %335, %344, %cst_156 {dimension_numbers = #tpu.dot_dimension_numbers<[1], [0], [0], [1], [0, 0, 1, 1], [], []>} : vector<32x128xbf16>, vector<128x128xbf16>, vector<32x128xf32> -> vector<32x128xf32>
    %c1_157 = arith.constant 1 : index
    %c0_158 = arith.constant 0 : index
    %c0_159 = arith.constant 0 : index
    %346 = vector.load %arg7[%c1_157, %c0_158, %c0_159] : memref<3x128x128xbf16, #tpu.memory_space<vmem>>, vector<1x128x128xbf16>
    %347 = vector.shape_cast %346 : vector<1x128x128xbf16> to vector<128x128xbf16>
    %cst_160 = arith.constant dense<0.000000e+00> : vector<32x128xf32>
    %348 = tpu.matmul %328, %347, %cst_160 {dimension_numbers = #tpu.dot_dimension_numbers<[1], [0], [0], [1], [0, 0, 1, 1], [], []>} : vector<32x128xbf16>, vector<128x128xbf16>, vector<32x128xf32> -> vector<32x128xf32>
    %349 = arith.addf %345, %348 : vector<32x128xf32>
    %c2_161 = arith.constant 2 : index
    %c0_162 = arith.constant 0 : index
    %c0_163 = arith.constant 0 : index
    %350 = vector.load %arg7[%c2_161, %c0_162, %c0_163] : memref<3x128x128xbf16, #tpu.memory_space<vmem>>, vector<1x128x128xbf16>
    %351 = vector.shape_cast %350 : vector<1x128x128xbf16> to vector<128x128xbf16>
    %cst_164 = arith.constant dense<0.000000e+00> : vector<32x128xf32>
    %352 = tpu.matmul %342, %351, %cst_164 {dimension_numbers = #tpu.dot_dimension_numbers<[1], [0], [0], [1], [0, 0, 1, 1], [], []>} : vector<32x128xbf16>, vector<128x128xbf16>, vector<32x128xf32> -> vector<32x128xf32>
    %353 = arith.addf %349, %352 : vector<32x128xf32>
    %cst_165 = arith.constant dense<0.000000e+00> : vector<128xf32>
    %354 = vector.multi_reduction <add>, %353, %cst_165 [0] : vector<32x128xf32> to vector<128xf32>
    %355 = vector.shape_cast %354 : vector<128xf32> to vector<1x128xf32>
    %c8_i32_166 = arith.constant 8 : i32
    %356 = tpu.dynamic_rotate %355 by %c8_i32_166 dim 1 : vector<1x128xf32>, i32 -> vector<1x128xf32>
    %357 = arith.addf %355, %356 : vector<1x128xf32>
    %c16_i32_167 = arith.constant 16 : i32
    %358 = tpu.dynamic_rotate %357 by %c16_i32_167 dim 1 : vector<1x128xf32>, i32 -> vector<1x128xf32>
    %359 = arith.addf %357, %358 : vector<1x128xf32>
    %c32_i32_168 = arith.constant 32 : i32
    %360 = tpu.dynamic_rotate %359 by %c32_i32_168 dim 1 : vector<1x128xf32>, i32 -> vector<1x128xf32>
    %361 = arith.addf %359, %360 : vector<1x128xf32>
    %c64_i32_169 = arith.constant 64 : i32
    %362 = tpu.dynamic_rotate %361 by %c64_i32_169 dim 1 : vector<1x128xf32>, i32 -> vector<1x128xf32>
    %363 = arith.addf %361, %362 : vector<1x128xf32>
    %364 = arith.mulf %353, %353 : vector<32x128xf32>
    %cst_170 = arith.constant dense<0.000000e+00> : vector<128xf32>
    %365 = vector.multi_reduction <add>, %364, %cst_170 [0] : vector<32x128xf32> to vector<128xf32>
    %366 = vector.shape_cast %365 : vector<128xf32> to vector<1x128xf32>
    %c8_i32_171 = arith.constant 8 : i32
    %367 = tpu.dynamic_rotate %366 by %c8_i32_171 dim 1 : vector<1x128xf32>, i32 -> vector<1x128xf32>
    %368 = arith.addf %366, %367 : vector<1x128xf32>
    %c16_i32_172 = arith.constant 16 : i32
    %369 = tpu.dynamic_rotate %368 by %c16_i32_172 dim 1 : vector<1x128xf32>, i32 -> vector<1x128xf32>
    %370 = arith.addf %368, %369 : vector<1x128xf32>
    %c32_i32_173 = arith.constant 32 : i32
    %371 = tpu.dynamic_rotate %370 by %c32_i32_173 dim 1 : vector<1x128xf32>, i32 -> vector<1x128xf32>
    %372 = arith.addf %370, %371 : vector<1x128xf32>
    %c64_i32_174 = arith.constant 64 : i32
    %373 = tpu.dynamic_rotate %372 by %c64_i32_174 dim 1 : vector<1x128xf32>, i32 -> vector<1x128xf32>
    %374 = arith.addf %372, %373 : vector<1x128xf32>
    %cst_175 = arith.constant 0.001953125 : f32
    %375 = vector.broadcast %cst_175 : f32 to vector<1x128xf32>
    %376 = arith.mulf %363, %375 : vector<1x128xf32>
    %cst_176 = arith.constant 0.001953125 : f32
    %377 = vector.broadcast %cst_176 : f32 to vector<1x128xf32>
    %378 = arith.mulf %374, %377 : vector<1x128xf32>
    %379 = arith.mulf %376, %376 : vector<1x128xf32>
    %380 = arith.subf %378, %379 : vector<1x128xf32>
    %c5 = arith.constant 5 : index
    %c0_177 = arith.constant 0 : index
    %c0_178 = arith.constant 0 : index
    %381 = vector.load %arg8[%c5, %c0_177, %c0_178] : memref<6x1x128xf32, #tpu.memory_space<vmem>>, vector<1x1x128xf32>
    %382 = vector.shape_cast %381 : vector<1x1x128xf32> to vector<1x128xf32>
    %cst_179 = arith.constant 9.99999974E-6 : f32
    %383 = vector.broadcast %cst_179 : f32 to vector<1x128xf32>
    %384 = arith.addf %380, %383 : vector<1x128xf32>
    %385 = math.rsqrt %384 : vector<1x128xf32>
    %386 = arith.mulf %382, %385 : vector<1x128xf32>
    %c5_180 = arith.constant 5 : index
    %c0_181 = arith.constant 0 : index
    %c0_182 = arith.constant 0 : index
    %387 = vector.load %arg9[%c5_180, %c0_181, %c0_182] : memref<6x1x128xf32, #tpu.memory_space<vmem>>, vector<1x1x128xf32>
    %388 = vector.shape_cast %387 : vector<1x1x128xf32> to vector<1x128xf32>
    %389 = arith.mulf %376, %386 : vector<1x128xf32>
    %390 = arith.subf %388, %389 : vector<1x128xf32>
    %391 = vector.broadcast %386 : vector<1x128xf32> to vector<32x128xf32>
    %392 = arith.mulf %353, %391 : vector<32x128xf32>
    %393 = vector.broadcast %390 : vector<1x128xf32> to vector<32x128xf32>
    %394 = arith.addf %392, %393 : vector<32x128xf32>
    %cst_183 = arith.constant 0.000000e+00 : f32
    %395 = vector.broadcast %cst_183 : f32 to vector<32x128xf32>
    %396 = arith.maximumf %394, %395 : vector<32x128xf32>
    %397 = arith.addf %256, %396 : vector<32x128xf32>
    %c0_184 = arith.constant 0 : index
    %c0_185 = arith.constant 0 : index
    %398 = vector.load %arg10[%c0_184, %c0_185] : memref<32x128xf32, #tpu.memory_space<vmem>>, vector<32x128xf32>
    tpu.vector_store %arg10[%c0_184, %c0_185], %397 {strides = array<i32>} : memref<32x128xf32, #tpu.memory_space<vmem>>, vector<32x128xf32>,
    return
  }
}

</mosaic_0001>

<llo_original>
// kernel: tile.93
$region0: #{tile.93}
  #allocation0 [shape = 's32[1]{0}', space=sflag, size = 0x4, scoped, tag = 'scoped memory for tile.93']
  %s0 = inlined_call_operand.vmem [shape: f32[8], index: 0, kind: input, shape index: {}]
  %s1 = inlined_call_operand.vmem [shape: f32[16,8], index: 1, kind: output, shape index: {}]
  // Predicated region
  $region2: #{tile.93} parent=0 // pred_check
    _
  $region3: #{tile.93} parent=0 // pred_check_branch
    %3 = sbr.rel (0) target = $region5
  $region4: #{tile.93} parent=0 // pred_region
    _
  $region5: #{tile.93} parent=0 // pred_fallthru
    _
  %v4 = vld [vmem:[%s0] ss:$0 sm:$0xff]
  %5 = vst [vmem:[%s1] sm:$0xff] %v4
  %s6 = scalar_lea.vmem %s1, 8
  %7 = vst [vmem:[%s6] sm:$0xff] %v4

// kernel: tile.114
$region0: #{tile.114}
  %s0 = inlined_call_operand.vmem [shape: f32[16,8], index: 0, kind: input, shape index: {}]
  %s1 = inlined_call_operand.vmem [shape: f32[1,1,128], index: 1, kind: output, shape index: {}]
  $region1: #{tile.114} parent=0
    #allocation0 [shape = 'u8[4096]{0}', space=vmem, size = 0x1000, scoped, tag = 'scoped mem for output reshape']
    %v2 = vld [vmem:[%s0] sm:$0x1]
    %vm3 = vcmask 64512
    %4 = vst.msk [vmem:[#allocation0] sm:$0x1] %vm3, %v2
    %s5 = scalar_lea.vmem %s0, 15
    %v6 = vld [vmem:[%s5] sm:$0x1]
    %7 = vrot.lane.b32.xlu0 %v6, 120
    %v8 = vpop.permute.xlu0 %7
    %vm9 = vcmask 1048512
    %10 = vst.msk [vmem:[#allocation0] sm:$0x1] %vm9, %v8
    %s11 = scalar_lea.vmem %s0, 14
    %v12 = vld [vmem:[%s11] sm:$0x1]
    %13 = vrot.lane.b32.xlu0 %v12, 112
    %v14 = vpop.permute.xlu0 %13
    %vm15 = vcmask 982912
    %16 = vst.msk [vmem:[#allocation0] sm:$0x1] %vm15, %v14
    %s17 = scalar_lea.vmem %s0, 13
    %v18 = vld [vmem:[%s17] sm:$0x1]
    %19 = vrot.lane.b32.xlu0 %v18, 104
    %v20 = vpop.permute.xlu0 %19
    %vm21 = vcmask 917312
    %22 = vst.msk [vmem:[#allocation0] sm:$0x1] %vm21, %v20
    %s23 = scalar_lea.vmem %s0, 12
    %v24 = vld [vmem:[%s23] sm:$0x1]
    %25 = vrot.lane.b32.xlu0 %v24, 96
    %v26 = vpop.permute.xlu0 %25
    %vm27 = vcmask 851712
    %28 = vst.msk [vmem:[#allocation0] sm:$0x1] %vm27, %v26
    %s29 = scalar_lea.vmem %s0, 11
    %v30 = vld [vmem:[%s29] sm:$0x1]
    %31 = vrot.lane.b32.xlu0 %v30, 88
    %v32 = vpop.permute.xlu0 %31
    %vm33 = vcmask 786112
    %34 = vst.msk [vmem:[#allocation0] sm:$0x1] %vm33, %v32
    %s35 = scalar_lea.vmem %s0, 10
    %v36 = vld [vmem:[%s35] sm:$0x1]
    %37 = vrot.lane.b32.xlu0 %v36, 80
    %v38 = vpop.permute.xlu0 %37
    %vm39 = vcmask 720512
    %40 = vst.msk [vmem:[#allocation0] sm:$0x1] %vm39, %v38
    %s41 = scalar_lea.vmem %s0, 9
    %v42 = vld [vmem:[%s41] sm:$0x1]
    %43 = vrot.lane.b32.xlu0 %v42, 72
    %v44 = vpop.permute.xlu0 %43
    %vm45 = vcmask 654912
    %46 = vst.msk [vmem:[#allocation0] sm:$0x1] %vm45, %v44
    %s47 = scalar_lea.vmem %s0, 8
    %v48 = vld [vmem:[%s47] sm:$0x1]
    %49 = vrot.lane.b32.xlu0 %v48, 64
    %v50 = vpop.permute.xlu0 %49
    %vm51 = vcmask 589312
    %52 = vst.msk [vmem:[#allocation0] sm:$0x1] %vm51, %v50
    %s53 = scalar_lea.vmem %s0, 7
    %v54 = vld [vmem:[%s53] sm:$0x1]
    %55 = vrot.lane.b32.xlu0 %v54, 56
    %v56 = vpop.permute.xlu0 %55
    %vm57 = vcmask 523712
    %58 = vst.msk [vmem:[#allocation0] sm:$0x1] %vm57, %v56
    %s59 = scalar_lea.vmem %s0, 6
    %v60 = vld [vmem:[%s59] sm:$0x1]
    %61 = vrot.lane.b32.xlu0 %v60, 48
    %v62 = vpop.permute.xlu0 %61
    %vm63 = vcmask 458112
    %64 = vst.msk [vmem:[#allocation0] sm:$0x1] %vm63, %v62
    %s65 = scalar_lea.vmem %s0, 5
    %v66 = vld [vmem:[%s65] sm:$0x1]
    %67 = vrot.lane.b32.xlu0 %v66, 40
    %v68 = vpop.permute.xlu0 %67
    %vm69 = vcmask 392512
    %70 = vst.msk [vmem:[#allocation0] sm:$0x1] %vm69, %v68
    %s71 = scalar_lea.vmem %s0, 4
    %v72 = vld [vmem:[%s71] sm:$0x1]
    %73 = vrot.lane.b32.xlu0 %v72, 32
    %v74 = vpop.permute.xlu0 %73
    %vm75 = vcmask 326912
    %76 = vst.msk [vmem:[#allocation0] sm:$0x1] %vm75, %v74
    %s77 = scalar_lea.vmem %s0, 3
    %v78 = vld [vmem:[%s77] sm:$0x1]
    %79 = vrot.lane.b32.xlu0 %v78, 24
    %v80 = vpop.permute.xlu0 %79
    %vm81 = vcmask 261312
    %82 = vst.msk [vmem:[#allocation0] sm:$0x1] %vm81, %v80
    %s83 = scalar_lea.vmem %s0, 2
    %v84 = vld [vmem:[%s83] sm:$0x1]
    %85 = vrot.lane.b32.xlu0 %v84, 16
    %v86 = vpop.permute.xlu0 %85
    %vm87 = vcmask 195712
    %88 = vst.msk [vmem:[#allocation0] sm:$0x1] %vm87, %v86
    %s89 = scalar_lea.vmem %s0, 1
    %v90 = vld [vmem:[%s89] sm:$0x1]
    %91 = vrot.lane.b32.xlu0 %v90, 8
    %v92 = vpop.permute.xlu0 %91
    %vm93 = vcmask 130112
    %94 = vst.msk [vmem:[#allocation0] sm:$0x1] %vm93, %v92
    %s96 = ssub.s32 2, 1
    %v97 = vld [vmem:[#allocation0] sm:%s96]
    %s99 = ssub.s32 2, 1
    %100 = vst [vmem:[%s1] sm:%s99] %v97

// kernel: decoder_block_forward.1
$region0: #{decoder_block_forward.1}
  #allocation0 [shape = 'u32[]', space=smem, size = 0x4, offset = 0x4, fixed_abs, tag = 'smem constant byte address 0x4 - core index']
  #allocation1 [shape = 'u32[72,128]{1,0:T(1,128)}', space=vmem, size = 0x9000, scoped, tag = 'internal scratch']
  %s0 = inlined_call_operand.vmem [shape: f32[32,64], index: 0, kind: input, shape index: {}]
  %s1 = inlined_call_operand.vmem [shape: f32[32,96], index: 1, kind: input, shape index: {}]
  %s2 = inlined_call_operand.vmem [shape: bf16[64,128], index: 2, kind: input, shape index: {}]
  %s3 = inlined_call_operand.vmem [shape: bf16[96,128], index: 3, kind: input, shape index: {}]
  %s4 = inlined_call_operand.vmem [shape: bf16[3,64,128], index: 4, kind: input, shape index: {}]
  %s5 = inlined_call_operand.vmem [shape: bf16[3,128,128], index: 5, kind: input, shape index: {}]
  %s6 = inlined_call_operand.vmem [shape: bf16[3,128,128], index: 6, kind: input, shape index: {}]
  %s7 = inlined_call_operand.vmem [shape: bf16[3,128,128], index: 7, kind: input, shape index: {}]
  %s8 = inlined_call_operand.vmem [shape: f32[6,1,128], index: 8, kind: input, shape index: {}]
  %s9 = inlined_call_operand.vmem [shape: f32[6,1,128], index: 9, kind: input, shape index: {}]
  %s10 = inlined_call_operand.vmem [shape: f32[32,128], index: 10, kind: output, shape index: {}]
  %s11 = sld [smem:[#allocation0]]
  $region50: #{decoder_block_forward.1} parent=0
    _
  %s13 = ssub.s32 1, %s11
  %s14 = scalar_select 0, %s13, %s11
  // Predicated region
  $region2: #{decoder_block_forward.1} parent=0 // pred_check
    _
  $region3: #{decoder_block_forward.1} parent=0 // pred_check_branch
    %16 = sbr.rel (0) target = $region5
  $region4: #{decoder_block_forward.1} parent=0 // pred_region
    _
  $region5: #{decoder_block_forward.1} parent=0 // pred_fallthru
    _
  // Predicated region
  $region6: #{decoder_block_forward.1} parent=0 // pred_check
    _
  $region7: #{decoder_block_forward.1} parent=0 // pred_check_branch
    %18 = sbr.rel (0) target = $region9
  $region8: #{decoder_block_forward.1} parent=0 // pred_region
    _
  $region9: #{decoder_block_forward.1} parent=0 // pred_fallthru
    _
  // Predicated region
  $region10: #{decoder_block_forward.1} parent=0 // pred_check
    _
  $region11: #{decoder_block_forward.1} parent=0 // pred_check_branch
    %20 = sbr.rel (0) target = $region13
  $region12: #{decoder_block_forward.1} parent=0 // pred_region
    _
  $region13: #{decoder_block_forward.1} parent=0 // pred_fallthru
    _
  // Predicated region
  $region14: #{decoder_block_forward.1} parent=0 // pred_check
    _
  $region15: #{decoder_block_forward.1} parent=0 // pred_check_branch
    %22 = sbr.rel (0) target = $region17
  $region16: #{decoder_block_forward.1} parent=0 // pred_region
    _
  $region17: #{decoder_block_forward.1} parent=0 // pred_fallthru
    _
  // Predicated region
  $region18: #{decoder_block_forward.1} parent=0 // pred_check
    _
  $region19: #{decoder_block_forward.1} parent=0 // pred_check_branch
    %24 = sbr.rel (0) target = $region21
  $region20: #{decoder_block_forward.1} parent=0 // pred_region
    _
  $region21: #{decoder_block_forward.1} parent=0 // pred_fallthru
    _
  // Predicated region
  $region22: #{decoder_block_forward.1} parent=0 // pred_check
    _
  $region23: #{decoder_block_forward.1} parent=0 // pred_check_branch
    %26 = sbr.rel (0) target = $region25
  $region24: #{decoder_block_forward.1} parent=0 // pred_region
    _
  $region25: #{decoder_block_forward.1} parent=0 // pred_fallthru
    _
  // Predicated region
  $region26: #{decoder_block_forward.1} parent=0 // pred_check
    _
  $region27: #{decoder_block_forward.1} parent=0 // pred_check_branch
    %28 = sbr.rel (0) target = $region29
  $region28: #{decoder_block_forward.1} parent=0 // pred_region
    _
  $region29: #{decoder_block_forward.1} parent=0 // pred_fallthru
    _
  // Predicated region
  $region30: #{decoder_block_forward.1} parent=0 // pred_check
    _
  $region31: #{decoder_block_forward.1} parent=0 // pred_check_branch
    %30 = sbr.rel (0) target = $region33
  $region32: #{decoder_block_forward.1} parent=0 // pred_region
    _
  $region33: #{decoder_block_forward.1} parent=0 // pred_fallthru
    _
  // Predicated region
  $region34: #{decoder_block_forward.1} parent=0 // pred_check
    _
  $region35: #{decoder_block_forward.1} parent=0 // pred_check_branch
    %32 = sbr.rel (0) target = $region37
  $region36: #{decoder_block_forward.1} parent=0 // pred_region
    _
  $region37: #{decoder_block_forward.1} parent=0 // pred_fallthru
    _
  // Predicated region
  $region38: #{decoder_block_forward.1} parent=0 // pred_check
    _
  $region39: #{decoder_block_forward.1} parent=0 // pred_check_branch
    %34 = sbr.rel (0) target = $region41
  $region40: #{decoder_block_forward.1} parent=0 // pred_region
    _
  $region41: #{decoder_block_forward.1} parent=0 // pred_fallthru
    _
  %v36 = vlaneseq
  %v37 = vshrl.u32 %v36, 7
  %v38 = vadd.s32 %v37, 8
  %v39 = vadd.s32 %v37, 16
  %v40 = vadd.s32 %v37, 24
  %vm41 = vcmp.lt.s32.totalorder %v37, 0
  %v42 = vsub.s32 0, %v37
  %v43 = vsel %vm41, %v42, %v37
  %v44 = vshrl.u32 %v43, 4
  %v45 = vand.u32 %v43, 15
  %v46 = vsub.s32 0, %v45
  %v47 = vsel %vm41, %v46, %v45
  %vm48 = vcmp.lt.s32.totalorder %v38, 0
  %v49 = vsub.s32 0, %v38
  %v50 = vsel %vm48, %v49, %v38
  %v51 = vshrl.u32 %v50, 4
  %v52 = vand.u32 %v50, 15
  %v53 = vsub.s32 0, %v52
  %v54 = vsel %vm48, %v53, %v52
  %vm55 = vcmp.lt.s32.totalorder %v39, 0
  %v56 = vsub.s32 0, %v39
  %v57 = vsel %vm55, %v56, %v39
  %v58 = vshrl.u32 %v57, 4
  %v59 = vand.u32 %v57, 15
  %v60 = vsub.s32 0, %v59
  %v61 = vsel %vm55, %v60, %v59
  %vm62 = vcmp.lt.s32.totalorder %v40, 0
  %v63 = vsub.s32 0, %v40
  %v64 = vsel %vm62, %v63, %v40
  %v65 = vshrl.u32 %v64, 4
  %v66 = vand.u32 %v64, 15
  %v67 = vsub.s32 0, %v66
  %v68 = vsel %vm62, %v67, %v66
  %vm69 = vcmp.ne.s32.totalorder %v47, 0
  %vm70 = vcmp.ne.s32.totalorder %v54, 0
  %vm71 = vcmp.ne.s32.totalorder %v61, 0
  %vm72 = vcmp.ne.s32.totalorder %v68, 0
  %vm73 = vcmp.lt.s32.totalorder %v47, 0
  %vm74 = vcmp.lt.s32.totalorder %v54, 0
  %vm75 = vcmp.lt.s32.totalorder %v61, 0
  %vm76 = vcmp.lt.s32.totalorder %v68, 0
  %vm77 = vmand %vm73, %vm69
  %vm78 = vmand %vm74, %vm70
  %vm79 = vmand %vm75, %vm71
  %vm80 = vmand %vm76, %vm72
  %v81 = vadd.s32 %v47, 16
  %v82 = vadd.s32 %v54, 16
  %v83 = vadd.s32 %v61, 16
  %v84 = vadd.s32 %v68, 16
  %v85 = vsel %vm77, %v81, %v47
  %v86 = vsel %vm78, %v82, %v54
  %v87 = vsel %vm79, %v83, %v61
  %v88 = vsel %vm80, %v84, %v68
  %vm89 = vcmp.gt.s32.totalorder %v85, 0
  %vm90 = vcmp.gt.s32.totalorder %v86, 0
  %vm91 = vcmp.gt.s32.totalorder %v87, 0
  %vm92 = vcmp.gt.s32.totalorder %v88, 0
  %vm93 = vcmp.lt.s32.totalorder %v85, 15
  %vm94 = vcmp.lt.s32.totalorder %v86, 15
  %vm95 = vcmp.lt.s32.totalorder %v87, 15
  %vm96 = vcmp.lt.s32.totalorder %v88, 15
  %v97 = vld [vmem:[%s0] sm:$0xff]
  %v98 = vld [vmem:[%s0 + $0x8] sm:$0xff]
  %v99 = vld [vmem:[%s0 + $0x10] sm:$0xff]
  %v100 = vld [vmem:[%s0 + $0x18] sm:$0xff]
  %v101 = vld [vmem:[%s1] sm:$0xff]
  %v102 = vld [vmem:[%s1 + $0x8] sm:$0xff]
  %v103 = vld [vmem:[%s1 + $0x10] sm:$0xff]
  %v104 = vld [vmem:[%s1 + $0x18] sm:$0xff]
  %v105 = vpack.c.bf16 %v98, %v97
  %v106 = vpack.c.bf16 %v100, %v99
  %v107 = vld [vmem:[%s2] sm:$0xf]
  %v108 = vld [vmem:[%s2 + $0x4] sm:$0xf]
  %v109 = vld [vmem:[%s2 + $0x8] sm:$0xf]
  %v110 = vld [vmem:[%s2 + $0xc] sm:$0xf]
  %v111 = vld [vmem:[%s2 + $0x10] sm:$0xf]
  %v112 = vld [vmem:[%s2 + $0x14] sm:$0xf]
  %v113 = vld [vmem:[%s2 + $0x18] sm:$0xf]
  %v114 = vld [vmem:[%s2 + $0x1c] sm:$0xf]
  %v123 = vunpack.c.l.b16 %v107
  %v124 = vunpack.c.l.b16 %v108
  %v125 = vunpack.c.l.b16 %v109
  %v126 = vunpack.c.l.b16 %v110
  %v127 = vunpack.c.l.b16 %v111
  %v128 = vunpack.c.l.b16 %v112
  %v129 = vunpack.c.l.b16 %v113
  %v130 = vunpack.c.l.b16 %v114
  %v131 = vpack.c.b16 %v124, %v123
  %v132 = vpack.c.b16 %v126, %v125
  %v133 = vpack.c.b16 %v128, %v127
  %v134 = vpack.c.b16 %v130, %v129
  %vm139 = vcmask 523264
  %v141 = vsel %vm139, %v105, 0
  %v144 = vsel %vm139, %v106, 0
  %146 = vmatpush.bf16.msra.mxu0 0
  %147 = vmatpush.bf16.msra.mxu0 0
  %148 = vmatpush.bf16.msra.mxu0 0
  %149 = vmatpush.bf16.msra.mxu0 0
  %150 = vmatpush.bf16.msra.mxu0 %v134
  %151 = vmatpush.bf16.msra.mxu0 %v133
  %152 = vmatpush.bf16.msra.mxu0 %v132
  %153 = vmatpush.bf16.msra.mxu0 %v131
  %154 = vmatmul.bf16.gmra.mxu0 %v141
  %v155 = vpop.f32.mrf.mxu0
  %v156 = vadd.f32 0.0, %v155
  %v157 = vpop.f32.mrf.mxu0
  %v158 = vadd.f32 0.0, %v157
  %159 = vmatmul.bf16.gmra.mxu0 %v144
  %v160 = vpop.f32.mrf.mxu0
  %v161 = vadd.f32 0.0, %v160
  %v162 = vpop.f32.mrf.mxu0
  %v163 = vadd.f32 0.0, %v162
  %164 = vdwg.mxu0
  %v165 = vadd.f32 %v156, %v158
  %v166 = vadd.f32 %v165, %v161
  %v167 = vadd.f32 %v166, %v163
  %v168 = vrot.slane %v167, 4
  %v169 = vadd.f32 %v167, %v168
  %v170 = vrot.slane %v169, 2
  %v171 = vadd.f32 %v169, %v170
  %v172 = vrot.slane %v171, 1
  %v173 = vadd.f32 %v171, %v172
  %174 = vrot.lane.b32.xlu0 %v173, 8
  %v175 = vpop.permute.xlu0 %174
  %v176 = vadd.f32 %v173, %v175
  %177 = vrot.lane.b32.xlu0 %v176, 16
  %v178 = vpop.permute.xlu0 %177
  %v179 = vadd.f32 %v176, %v178
  %180 = vrot.lane.b32.xlu0 %v179, 32
  %v181 = vpop.permute.xlu0 %180
  %v182 = vadd.f32 %v179, %v181
  %183 = vrot.lane.b32.xlu0 %v182, 64
  %v184 = vpop.permute.xlu0 %183
  %v185 = vadd.f32 %v182, %v184
  %v186 = vmul.f32 %v156, %v156
  %v187 = vmul.f32 %v158, %v158
  %v188 = vmul.f32 %v161, %v161
  %v189 = vmul.f32 %v163, %v163
  %v190 = vadd.f32 %v186, %v187
  %v191 = vadd.f32 %v190, %v188
  %v192 = vadd.f32 %v191, %v189
  %v193 = vrot.slane %v192, 4
  %v194 = vadd.f32 %v192, %v193
  %v195 = vrot.slane %v194, 2
  %v196 = vadd.f32 %v194, %v195
  %v197 = vrot.slane %v196, 1
  %v198 = vadd.f32 %v196, %v197
  %199 = vrot.lane.b32.xlu0 %v198, 8
  %v200 = vpop.permute.xlu0 %199
  %v201 = vadd.f32 %v198, %v200
  %202 = vrot.lane.b32.xlu0 %v201, 16
  %v203 = vpop.permute.xlu0 %202
  %v204 = vadd.f32 %v201, %v203
  %205 = vrot.lane.b32.xlu0 %v204, 32
  %v206 = vpop.permute.xlu0 %205
  %v207 = vadd.f32 %v204, %v206
  %208 = vrot.lane.b32.xlu0 %v207, 64
  %v209 = vpop.permute.xlu0 %208
  %v210 = vadd.f32 %v207, %v209
  %v211 = vmul.f32 %v185, 0.001953125
  %v212 = vmul.f32 %v210, 0.001953125
  %v213 = vmul.f32 %v211, %v211
  %v214 = vsub.f32 %v212, %v213
  %v215 = vld [vmem:[%s8] sm:$0x1]
  %v216 = vadd.f32 %v214, 1e-05
  %v217 = vrsqrt.pop %v216
  %v218 = vmul.f32 %v217, %v216
  %v219 = vmul.f32 %v218, %v217
  %v220 = vmul.f32 0.5, %v219
  %v221 = vsub.f32 1.5, %v220
  %v222 = vmul.f32 %v217, %v221
  %vm223 = vweird.f32 %v216
  %vm224 = vweird.f32 %v217
  %vm225 = vmor %vm223, %vm224
  %v226 = vsel %vm225, %v217, %v222
  %v227 = vmul.f32 %v215, %v226
  %v228 = vld [vmem:[%s9] sm:$0x1]
  %v229 = vmul.f32 %v211, %v227
  %v230 = vsub.f32 %v228, %v229
  %v232 = vperm.slane %v227, 0
  %v234 = vmul.f32 %v156, %v232
  %v235 = vmul.f32 %v158, %v232
  %v236 = vmul.f32 %v161, %v232
  %v237 = vmul.f32 %v163, %v232
  %v239 = vperm.slane %v230, 0
  %v241 = vadd.f32 %v234, %v239
  %v242 = vadd.f32 %v235, %v239
  %v243 = vadd.f32 %v236, %v239
  %v244 = vadd.f32 %v237, %v239
  %v245 = vmax.f32 %v241, 0.0
  %v246 = vmax.f32 %v242, 0.0
  %v247 = vmax.f32 %v243, 0.0
  %v248 = vmax.f32 %v244, 0.0
  %vm253 = vcmask 1040384
  %v254 = vrot.slane %v97, 7
  %v255 = vrot.slane %v98, 7
  %v256 = vsel %vm253, %v254, %v255
  %v257 = vrot.slane %v99, 7
  %v258 = vsel %vm253, %v255, %v257
  %v259 = vrot.slane %v100, 7
  %v260 = vsel %vm253, %v257, %v259
  %v265 = vsel %vm253, 0.0, %v254
  %v266 = vsel %vm89, 1, 0
  %v267 = vsel %vm90, 1, 0
  %v268 = vsel %vm91, 1, 0
  %v269 = vsel %vm92, 1, 0
  %vm270 = vcmp.eq.s32.totalorder %v266, 1
  %vm271 = vcmp.eq.s32.totalorder %v267, 1
  %vm272 = vcmp.eq.s32.totalorder %v268, 1
  %vm273 = vcmp.eq.s32.totalorder %v269, 1
  %v274 = vsel %vm270, %v265, 0.0
  %v275 = vsel %vm271, %v256, 0.0
  %v276 = vsel %vm272, %v258, 0.0
  %v277 = vsel %vm273, %v260, 0.0
  %v278 = vpack.c.bf16 %v275, %v274
  %v279 = vpack.c.bf16 %v277, %v276
  %vm280 = vcmask 1046528
  %v281 = vrot.slane %v97, 1
  %v282 = vrot.slane %v98, 1
  %v283 = vsel %vm280, %v281, %v282
  %v284 = vrot.slane %v99, 1
  %v285 = vsel %vm280, %v282, %v284
  %v286 = vrot.slane %v100, 1
  %v287 = vsel %vm280, %v284, %v286
  %v292 = vsel %vm280, %v286, 0.0
  %v293 = vsel %vm93, 1, 0
  %v294 = vsel %vm94, 1, 0
  %v295 = vsel %vm95, 1, 0
  %v296 = vsel %vm96, 1, 0
  %vm297 = vcmp.eq.s32.totalorder %v293, 1
  %vm298 = vcmp.eq.s32.totalorder %v294, 1
  %vm299 = vcmp.eq.s32.totalorder %v295, 1
  %vm300 = vcmp.eq.s32.totalorder %v296, 1
  %v301 = vsel %vm297, %v283, 0.0
  %v302 = vsel %vm298, %v285, 0.0
  %v303 = vsel %vm299, %v287, 0.0
  %v304 = vsel %vm300, %v292, 0.0
  %v305 = vpack.c.bf16 %v302, %v301
  %v306 = vpack.c.bf16 %v304, %v303
  %v307 = vld [vmem:[%s4] sm:$0xf]
  %v308 = vld [vmem:[%s4 + $0x4] sm:$0xf]
  %v309 = vld [vmem:[%s4 + $0x8] sm:$0xf]
  %v310 = vld [vmem:[%s4 + $0xc] sm:$0xf]
  %v311 = vld [vmem:[%s4 + $0x10] sm:$0xf]
  %v312 = vld [vmem:[%s4 + $0x14] sm:$0xf]
  %v313 = vld [vmem:[%s4 + $0x18] sm:$0xf]
  %v314 = vld [vmem:[%s4 + $0x1c] sm:$0xf]
  %s315 = scalar_lea.vmem %s4, 32
  %v316 = vld [vmem:[%s315] sm:$0xf]
  %v317 = vld [vmem:[%s315 + $0x4] sm:$0xf]
  %v318 = vld [vmem:[%s315 + $0x8] sm:$0xf]
  %v319 = vld [vmem:[%s315 + $0xc] sm:$0xf]
  %v320 = vld [vmem:[%s315 + $0x10] sm:$0xf]
  %v321 = vld [vmem:[%s315 + $0x14] sm:$0xf]
  %v322 = vld [vmem:[%s315 + $0x18] sm:$0xf]
  %v323 = vld [vmem:[%s315 + $0x1c] sm:$0xf]
  %v332 = vunpack.c.l.b16 %v316
  %v333 = vunpack.c.l.b16 %v317
  %v334 = vunpack.c.l.b16 %v318
  %v335 = vunpack.c.l.b16 %v319
  %v336 = vunpack.c.l.b16 %v320
  %v337 = vunpack.c.l.b16 %v321
  %v338 = vunpack.c.l.b16 %v322
  %v339 = vunpack.c.l.b16 %v323
  %v340 = vpack.c.b16 %v333, %v332
  %v341 = vpack.c.b16 %v335, %v334
  %v342 = vpack.c.b16 %v337, %v336
  %v343 = vpack.c.b16 %v339, %v338
  %348 = vmatpush.bf16.msra.mxu0 0
  %349 = vmatpush.bf16.msra.mxu0 0
  %350 = vmatpush.bf16.msra.mxu0 0
  %351 = vmatpush.bf16.msra.mxu0 0
  %352 = vmatpush.bf16.msra.mxu0 %v343
  %353 = vmatpush.bf16.msra.mxu0 %v342
  %354 = vmatpush.bf16.msra.mxu0 %v341
  %355 = vmatpush.bf16.msra.mxu0 %v340
  %356 = vmatmul.bf16.gmra.mxu0 %v141
  %v357 = vpop.f32.mrf.mxu0
  %v358 = vadd.f32 0.0, %v357
  %v359 = vpop.f32.mrf.mxu0
  %v360 = vadd.f32 0.0, %v359
  %361 = vmatmul.bf16.gmra.mxu0 %v144
  %v362 = vpop.f32.mrf.mxu0
  %v363 = vadd.f32 0.0, %v362
  %v364 = vpop.f32.mrf.mxu0
  %v365 = vadd.f32 0.0, %v364
  %366 = vdwg.mxu0
  %v375 = vunpack.c.l.b16 %v307
  %v376 = vunpack.c.l.b16 %v308
  %v377 = vunpack.c.l.b16 %v309
  %v378 = vunpack.c.l.b16 %v310
  %v379 = vunpack.c.l.b16 %v311
  %v380 = vunpack.c.l.b16 %v312
  %v381 = vunpack.c.l.b16 %v313
  %v382 = vunpack.c.l.b16 %v314
  %v383 = vpack.c.b16 %v376, %v375
  %v384 = vpack.c.b16 %v378, %v377
  %v385 = vpack.c.b16 %v380, %v379
  %v386 = vpack.c.b16 %v382, %v381
  %v392 = vsel %vm139, %v278, 0
  %v395 = vsel %vm139, %v279, 0
  %397 = vmatpush.bf16.msra.mxu0 0
  %398 = vmatpush.bf16.msra.mxu0 0
  %399 = vmatpush.bf16.msra.mxu0 0
  %400 = vmatpush.bf16.msra.mxu0 0
  %401 = vmatpush.bf16.msra.mxu0 %v386
  %402 = vmatpush.bf16.msra.mxu0 %v385
  %403 = vmatpush.bf16.msra.mxu0 %v384
  %404 = vmatpush.bf16.msra.mxu0 %v383
  %405 = vmatmul.bf16.gmra.mxu0 %v392
  %v406 = vpop.f32.mrf.mxu0
  %v407 = vadd.f32 %v358, %v406
  %v408 = vpop.f32.mrf.mxu0
  %v409 = vadd.f32 %v360, %v408
  %410 = vmatmul.bf16.gmra.mxu0 %v395
  %v411 = vpop.f32.mrf.mxu0
  %v412 = vadd.f32 %v363, %v411
  %v413 = vpop.f32.mrf.mxu0
  %v414 = vadd.f32 %v365, %v413
  %415 = vdwg.mxu0
  %s416 = scalar_lea.vmem %s4, 64
  %v417 = vld [vmem:[%s416] sm:$0xf]
  %v418 = vld [vmem:[%s416 + $0x4] sm:$0xf]
  %v419 = vld [vmem:[%s416 + $0x8] sm:$0xf]
  %v420 = vld [vmem:[%s416 + $0xc] sm:$0xf]
  %v421 = vld [vmem:[%s416 + $0x10] sm:$0xf]
  %v422 = vld [vmem:[%s416 + $0x14] sm:$0xf]
  %v423 = vld [vmem:[%s416 + $0x18] sm:$0xf]
  %v424 = vld [vmem:[%s416 + $0x1c] sm:$0xf]
  %v433 = vunpack.c.l.b16 %v417
  %v434 = vunpack.c.l.b16 %v418
  %v435 = vunpack.c.l.b16 %v419
  %v436 = vunpack.c.l.b16 %v420
  %v437 = vunpack.c.l.b16 %v421
  %v438 = vunpack.c.l.b16 %v422
  %v439 = vunpack.c.l.b16 %v423
  %v440 = vunpack.c.l.b16 %v424
  %v441 = vpack.c.b16 %v434, %v433
  %v442 = vpack.c.b16 %v436, %v435
  %v443 = vpack.c.b16 %v438, %v437
  %v444 = vpack.c.b16 %v440, %v439
  %v450 = vsel %vm139, %v305, 0
  %v453 = vsel %vm139, %v306, 0
  %455 = vmatpush.bf16.msra.mxu0 0
  %456 = vmatpush.bf16.msra.mxu0 0
  %457 = vmatpush.bf16.msra.mxu0 0
  %458 = vmatpush.bf16.msra.mxu0 0
  %459 = vmatpush.bf16.msra.mxu0 %v444
  %460 = vmatpush.bf16.msra.mxu0 %v443
  %461 = vmatpush.bf16.msra.mxu0 %v442
  %462 = vmatpush.bf16.msra.mxu0 %v441
  %463 = vmatmul.bf16.gmra.mxu0 %v450
  %v464 = vpop.f32.mrf.mxu0
  %v465 = vadd.f32 0.0, %v464
  %v466 = vpop.f32.mrf.mxu0
  %v467 = vadd.f32 0.0, %v466
  %468 = vmatmul.bf16.gmra.mxu0 %v453
  %v469 = vpop.f32.mrf.mxu0
  %v470 = vadd.f32 0.0, %v469
  %v471 = vpop.f32.mrf.mxu0
  %v472 = vadd.f32 0.0, %v471
  %473 = vdwg.mxu0
  %v474 = vadd.f32 %v407, %v465
  %v475 = vadd.f32 %v409, %v467
  %v476 = vadd.f32 %v412, %v470
  %v477 = vadd.f32 %v414, %v472
  %v478 = vadd.f32 %v474, %v475
  %v479 = vadd.f32 %v478, %v476
  %v480 = vadd.f32 %v479, %v477
  %v481 = vrot.slane %v480, 4
  %v482 = vadd.f32 %v480, %v481
  %v483 = vrot.slane %v482, 2
  %v484 = vadd.f32 %v482, %v483
  %v485 = vrot.slane %v484, 1
  %v486 = vadd.f32 %v484, %v485
  %487 = vrot.lane.b32.xlu0 %v486, 8
  %v488 = vpop.permute.xlu0 %487
  %v489 = vadd.f32 %v486, %v488
  %490 = vrot.lane.b32.xlu0 %v489, 16
  %v491 = vpop.permute.xlu0 %490
  %v492 = vadd.f32 %v489, %v491
  %493 = vrot.lane.b32.xlu0 %v492, 32
  %v494 = vpop.permute.xlu0 %493
  %v495 = vadd.f32 %v492, %v494
  %496 = vrot.lane.b32.xlu0 %v495, 64
  %v497 = vpop.permute.xlu0 %496
  %v498 = vadd.f32 %v495, %v497
  %v499 = vmul.f32 %v474, %v474
  %v500 = vmul.f32 %v475, %v475
  %v501 = vmul.f32 %v476, %v476
  %v502 = vmul.f32 %v477, %v477
  %v503 = vadd.f32 %v499, %v500
  %v504 = vadd.f32 %v503, %v501
  %v505 = vadd.f32 %v504, %v502
  %v506 = vrot.slane %v505, 4
  %v507 = vadd.f32 %v505, %v506
  %v508 = vrot.slane %v507, 2
  %v509 = vadd.f32 %v507, %v508
  %v510 = vrot.slane %v509, 1
  %v511 = vadd.f32 %v509, %v510
  %512 = vrot.lane.b32.xlu0 %v511, 8
  %v513 = vpop.permute.xlu0 %512
  %v514 = vadd.f32 %v511, %v513
  %515 = vrot.lane.b32.xlu0 %v514, 16
  %v516 = vpop.permute.xlu0 %515
  %v517 = vadd.f32 %v514, %v516
  %518 = vrot.lane.b32.xlu0 %v517, 32
  %v519 = vpop.permute.xlu0 %518
  %v520 = vadd.f32 %v517, %v519
  %521 = vrot.lane.b32.xlu0 %v520, 64
  %v522 = vpop.permute.xlu0 %521
  %v523 = vadd.f32 %v520, %v522
  %v524 = vmul.f32 %v498, 0.001953125
  %v525 = vmul.f32 %v523, 0.001953125
  %v526 = vmul.f32 %v524, %v524
  %v527 = vsub.f32 %v525, %v526
  %s528 = scalar_lea.vmem %s8, 2
  %v529 = vld [vmem:[%s528] sm:$0x1]
  %v530 = vadd.f32 %v527, 1e-05
  %v531 = vrsqrt.pop %v530
  %v532 = vmul.f32 %v531, %v530
  %v533 = vmul.f32 %v532, %v531
  %v534 = vmul.f32 0.5, %v533
  %v535 = vsub.f32 1.5, %v534
  %v536 = vmul.f32 %v531, %v535
  %vm537 = vweird.f32 %v530
  %vm538 = vweird.f32 %v531
  %vm539 = vmor %vm537, %vm538
  %v540 = vsel %vm539, %v531, %v536
  %v541 = vmul.f32 %v529, %v540
  %s542 = scalar_lea.vmem %s9, 2
  %v543 = vld [vmem:[%s542] sm:$0x1]
  %v544 = vmul.f32 %v524, %v541
  %v545 = vsub.f32 %v543, %v544
  %v547 = vperm.slane %v541, 0
  %v549 = vmul.f32 %v474, %v547
  %v550 = vmul.f32 %v475, %v547
  %v551 = vmul.f32 %v476, %v547
  %v552 = vmul.f32 %v477, %v547
  %v554 = vperm.slane %v545, 0
  %v556 = vadd.f32 %v549, %v554
  %v557 = vadd.f32 %v550, %v554
  %v558 = vadd.f32 %v551, %v554
  %v559 = vadd.f32 %v552, %v554
  %v560 = vmax.f32 %v556, 0.0
  %v561 = vmax.f32 %v557, 0.0
  %v562 = vmax.f32 %v558, 0.0
  %v563 = vmax.f32 %v559, 0.0
  %v564 = vpack.c.bf16 %v102, %v101
  %v565 = vpack.c.bf16 %v104, %v103
  %v566 = vld [vmem:[%s3] sm:$0xf]
  %v567 = vld [vmem:[%s3 + $0x4] sm:$0xf]
  %v568 = vld [vmem:[%s3 + $0x8] sm:$0xf]
  %v569 = vld [vmem:[%s3 + $0xc] sm:$0xf]
  %v570 = vld [vmem:[%s3 + $0x10] sm:$0xf]
  %v571 = vld [vmem:[%s3 + $0x14] sm:$0xf]
  %v572 = vld [vmem:[%s3 + $0x18] sm:$0xf]
  %v573 = vld [vmem:[%s3 + $0x1c] sm:$0xf]
  %v574 = vld [vmem:[%s3 + $0x20] sm:$0xf]
  %v575 = vld [vmem:[%s3 + $0x24] sm:$0xf]
  %v576 = vld [vmem:[%s3 + $0x28] sm:$0xf]
  %v577 = vld [vmem:[%s3 + $0x2c] sm:$0xf]
  %v590 = vunpack.c.l.b16 %v566
  %v591 = vunpack.c.l.b16 %v567
  %v592 = vunpack.c.l.b16 %v568
  %v593 = vunpack.c.l.b16 %v569
  %v594 = vunpack.c.l.b16 %v570
  %v595 = vunpack.c.l.b16 %v571
  %v596 = vunpack.c.l.b16 %v572
  %v597 = vunpack.c.l.b16 %v573
  %v598 = vunpack.c.l.b16 %v574
  %v599 = vunpack.c.l.b16 %v575
  %v600 = vunpack.c.l.b16 %v576
  %v601 = vunpack.c.l.b16 %v577
  %v602 = vpack.c.b16 %v591, %v590
  %v603 = vpack.c.b16 %v593, %v592
  %v604 = vpack.c.b16 %v595, %v594
  %v605 = vpack.c.b16 %v597, %v596
  %v606 = vpack.c.b16 %v599, %v598
  %v607 = vpack.c.b16 %v601, %v600
  %vm614 = vcmask 785408
  %v616 = vsel %vm614, %v564, 0
  %v619 = vsel %vm614, %v565, 0
  %621 = vmatpush.bf16.msra.mxu0 0
  %622 = vmatpush.bf16.msra.mxu0 0
  %623 = vmatpush.bf16.msra.mxu0 %v607
  %624 = vmatpush.bf16.msra.mxu0 %v606
  %625 = vmatpush.bf16.msra.mxu0 %v605
  %626 = vmatpush.bf16.msra.mxu0 %v604
  %627 = vmatpush.bf16.msra.mxu0 %v603
  %628 = vmatpush.bf16.msra.mxu0 %v602
  %629 = vmatmul.bf16.gmra.mxu0 %v616
  %v630 = vpop.f32.mrf.mxu0
  %v631 = vadd.f32 0.0, %v630
  %v632 = vpop.f32.mrf.mxu0
  %v633 = vadd.f32 0.0, %v632
  %634 = vmatmul.bf16.gmra.mxu0 %v619
  %v635 = vpop.f32.mrf.mxu0
  %v636 = vadd.f32 0.0, %v635
  %v637 = vpop.f32.mrf.mxu0
  %v638 = vadd.f32 0.0, %v637
  %639 = vdwg.mxu0
  %v640 = vadd.f32 %v631, %v633
  %v641 = vadd.f32 %v640, %v636
  %v642 = vadd.f32 %v641, %v638
  %v643 = vrot.slane %v642, 4
  %v644 = vadd.f32 %v642, %v643
  %v645 = vrot.slane %v644, 2
  %v646 = vadd.f32 %v644, %v645
  %v647 = vrot.slane %v646, 1
  %v648 = vadd.f32 %v646, %v647
  %649 = vrot.lane.b32.xlu0 %v648, 8
  %v650 = vpop.permute.xlu0 %649
  %v651 = vadd.f32 %v648, %v650
  %652 = vrot.lane.b32.xlu0 %v651, 16
  %v653 = vpop.permute.xlu0 %652
  %v654 = vadd.f32 %v651, %v653
  %655 = vrot.lane.b32.xlu0 %v654, 32
  %v656 = vpop.permute.xlu0 %655
  %v657 = vadd.f32 %v654, %v656
  %658 = vrot.lane.b32.xlu0 %v657, 64
  %v659 = vpop.permute.xlu0 %658
  %v660 = vadd.f32 %v657, %v659
  %v661 = vmul.f32 %v631, %v631
  %v662 = vmul.f32 %v633, %v633
  %v663 = vmul.f32 %v636, %v636
  %v664 = vmul.f32 %v638, %v638
  %v665 = vadd.f32 %v661, %v662
  %v666 = vadd.f32 %v665, %v663
  %v667 = vadd.f32 %v666, %v664
  %v668 = vrot.slane %v667, 4
  %v669 = vadd.f32 %v667, %v668
  %v670 = vrot.slane %v669, 2
  %v671 = vadd.f32 %v669, %v670
  %v672 = vrot.slane %v671, 1
  %v673 = vadd.f32 %v671, %v672
  %674 = vrot.lane.b32.xlu0 %v673, 8
  %v675 = vpop.permute.xlu0 %674
  %v676 = vadd.f32 %v673, %v675
  %677 = vrot.lane.b32.xlu0 %v676, 16
  %v678 = vpop.permute.xlu0 %677
  %v679 = vadd.f32 %v676, %v678
  %680 = vrot.lane.b32.xlu0 %v679, 32
  %v681 = vpop.permute.xlu0 %680
  %v682 = vadd.f32 %v679, %v681
  %683 = vrot.lane.b32.xlu0 %v682, 64
  %v684 = vpop.permute.xlu0 %683
  %v685 = vadd.f32 %v682, %v684
  %v686 = vmul.f32 %v660, 0.001953125
  %v687 = vmul.f32 %v685, 0.001953125
  %v688 = vmul.f32 %v686, %v686
  %v689 = vsub.f32 %v687, %v688
  %s690 = scalar_lea.vmem %s8, 1
  %v691 = vld [vmem:[%s690] sm:$0x1]
  %v692 = vadd.f32 %v689, 1e-05
  %v693 = vrsqrt.pop %v692
  %v694 = vmul.f32 %v693, %v692
  %v695 = vmul.f32 %v694, %v693
  %v696 = vmul.f32 0.5, %v695
  %v697 = vsub.f32 1.5, %v696
  %v698 = vmul.f32 %v693, %v697
  %vm699 = vweird.f32 %v692
  %vm700 = vweird.f32 %v693
  %vm701 = vmor %vm699, %vm700
  %v702 = vsel %vm701, %v693, %v698
  %v703 = vmul.f32 %v691, %v702
  %s704 = scalar_lea.vmem %s9, 1
  %v705 = vld [vmem:[%s704] sm:$0x1]
  %v706 = vmul.f32 %v686, %v703
  %v707 = vsub.f32 %v705, %v706
  %v709 = vperm.slane %v703, 0
  %v711 = vmul.f32 %v631, %v709
  %v712 = vmul.f32 %v633, %v709
  %v713 = vmul.f32 %v636, %v709
  %v714 = vmul.f32 %v638, %v709
  %v716 = vperm.slane %v707, 0
  %v718 = vadd.f32 %v711, %v716
  %v719 = vadd.f32 %v712, %v716
  %v720 = vadd.f32 %v713, %v716
  %v721 = vadd.f32 %v714, %v716
  %v722 = vmax.f32 %v718, 0.0
  %v723 = vmax.f32 %v719, 0.0
  %v724 = vmax.f32 %v720, 0.0
  %v725 = vmax.f32 %v721, 0.0
  %v726 = vadd.f32 %v560, %v722
  %v727 = vadd.f32 %v561, %v723
  %v728 = vadd.f32 %v562, %v724
  %v729 = vadd.f32 %v563, %v725
  %v730 = vpack.c.bf16 %v727, %v726
  %v731 = vpack.c.bf16 %v729, %v728
  %v736 = vrot.slane %v726, 7
  %v737 = vrot.slane %v727, 7
  %v738 = vsel %vm253, %v736, %v737
  %v739 = vrot.slane %v728, 7
  %v740 = vsel %vm253, %v737, %v739
  %v741 = vrot.slane %v729, 7
  %v742 = vsel %vm253, %v739, %v741
  %v747 = vsel %vm253, 0.0, %v736
  %v748 = vsel %vm270, %v747, 0.0
  %v749 = vsel %vm271, %v738, 0.0
  %v750 = vsel %vm272, %v740, 0.0
  %v751 = vsel %vm273, %v742, 0.0
  %v752 = vpack.c.bf16 %v749, %v748
  %v753 = vpack.c.bf16 %v751, %v750
  %v754 = vrot.slane %v726, 1
  %v755 = vrot.slane %v727, 1
  %v756 = vsel %vm280, %v754, %v755
  %v757 = vrot.slane %v728, 1
  %v758 = vsel %vm280, %v755, %v757
  %v759 = vrot.slane %v729, 1
  %v760 = vsel %vm280, %v757, %v759
  %v765 = vsel %vm280, %v759, 0.0
  %v766 = vsel %vm297, %v756, 0.0
  %v767 = vsel %vm298, %v758, 0.0
  %v768 = vsel %vm299, %v760, 0.0
  %v769 = vsel %vm300, %v765, 0.0
  %v770 = vpack.c.bf16 %v767, %v766
  %v771 = vpack.c.bf16 %v769, %v768
  %v772 = vld [vmem:[%s5] sm:$0xf]
  %v773 = vld [vmem:[%s5 + $0x4] sm:$0xf]
  %v774 = vld [vmem:[%s5 + $0x8] sm:$0xf]
  %v775 = vld [vmem:[%s5 + $0xc] sm:$0xf]
  %v776 = vld [vmem:[%s5 + $0x10] sm:$0xf]
  %v777 = vld [vmem:[%s5 + $0x14] sm:$0xf]
  %v778 = vld [vmem:[%s5 + $0x18] sm:$0xf]
  %v779 = vld [vmem:[%s5 + $0x1c] sm:$0xf]
  %v780 = vld [vmem:[%s5 + $0x20] sm:$0xf]
  %v781 = vld [vmem:[%s5 + $0x24] sm:$0xf]
  %v782 = vld [vmem:[%s5 + $0x28] sm:$0xf]
  %v783 = vld [vmem:[%s5 + $0x2c] sm:$0xf]
  %v784 = vld [vmem:[%s5 + $0x30] sm:$0xf]
  %v785 = vld [vmem:[%s5 + $0x34] sm:$0xf]
  %v786 = vld [vmem:[%s5 + $0x38] sm:$0xf]
  %v787 = vld [vmem:[%s5 + $0x3c] sm:$0xf]
  %s788 = scalar_lea.vmem %s5, 64
  %v789 = vld [vmem:[%s788] sm:$0xf]
  %v790 = vld [vmem:[%s788 + $0x4] sm:$0xf]
  %v791 = vld [vmem:[%s788 + $0x8] sm:$0xf]
  %v792 = vld [vmem:[%s788 + $0xc] sm:$0xf]
  %v793 = vld [vmem:[%s788 + $0x10] sm:$0xf]
  %v794 = vld [vmem:[%s788 + $0x14] sm:$0xf]
  %v795 = vld [vmem:[%s788 + $0x18] sm:$0xf]
  %v796 = vld [vmem:[%s788 + $0x1c] sm:$0xf]
  %v797 = vld [vmem:[%s788 + $0x20] sm:$0xf]
  %v798 = vld [vmem:[%s788 + $0x24] sm:$0xf]
  %v799 = vld [vmem:[%s788 + $0x28] sm:$0xf]
  %v800 = vld [vmem:[%s788 + $0x2c] sm:$0xf]
  %v801 = vld [vmem:[%s788 + $0x30] sm:$0xf]
  %v802 = vld [vmem:[%s788 + $0x34] sm:$0xf]
  %v803 = vld [vmem:[%s788 + $0x38] sm:$0xf]
  %v804 = vld [vmem:[%s788 + $0x3c] sm:$0xf]
  %v821 = vunpack.c.l.b16 %v789
  %v822 = vunpack.c.l.b16 %v790
  %v823 = vunpack.c.l.b16 %v791
  %v824 = vunpack.c.l.b16 %v792
  %v825 = vunpack.c.l.b16 %v793
  %v826 = vunpack.c.l.b16 %v794
  %v827 = vunpack.c.l.b16 %v795
  %v828 = vunpack.c.l.b16 %v796
  %v829 = vunpack.c.l.b16 %v797
  %v830 = vunpack.c.l.b16 %v798
  %v831 = vunpack.c.l.b16 %v799
  %v832 = vunpack.c.l.b16 %v800
  %v833 = vunpack.c.l.b16 %v801
  %v834 = vunpack.c.l.b16 %v802
  %v835 = vunpack.c.l.b16 %v803
  %v836 = vunpack.c.l.b16 %v804
  %v837 = vpack.c.b16 %v822, %v821
  %v838 = vpack.c.b16 %v824, %v823
  %v839 = vpack.c.b16 %v826, %v825
  %v840 = vpack.c.b16 %v828, %v827
  %v841 = vpack.c.b16 %v830, %v829
  %v842 = vpack.c.b16 %v832, %v831
  %v843 = vpack.c.b16 %v834, %v833
  %v844 = vpack.c.b16 %v836, %v835
  %853 = vmatpush.bf16.msra.mxu0 %v844
  %854 = vmatpush.bf16.msra.mxu0 %v843
  %855 = vmatpush.bf16.msra.mxu0 %v842
  %856 = vmatpush.bf16.msra.mxu0 %v841
  %857 = vmatpush.bf16.msra.mxu0 %v840
  %858 = vmatpush.bf16.msra.mxu0 %v839
  %859 = vmatpush.bf16.msra.mxu0 %v838
  %860 = vmatpush.bf16.msra.mxu0 %v837
  %861 = vmatmul.bf16.gmra.mxu0 %v730
  %v862 = vpop.f32.mrf.mxu0
  %v863 = vadd.f32 0.0, %v862
  %v864 = vpop.f32.mrf.mxu0
  %v865 = vadd.f32 0.0, %v864
  %866 = vmatmul.bf16.gmra.mxu0 %v731
  %v867 = vpop.f32.mrf.mxu0
  %v868 = vadd.f32 0.0, %v867
  %v869 = vpop.f32.mrf.mxu0
  %v870 = vadd.f32 0.0, %v869
  %871 = vdwg.mxu0
  %v888 = vunpack.c.l.b16 %v772
  %v889 = vunpack.c.l.b16 %v773
  %v890 = vunpack.c.l.b16 %v774
  %v891 = vunpack.c.l.b16 %v775
  %v892 = vunpack.c.l.b16 %v776
  %v893 = vunpack.c.l.b16 %v777
  %v894 = vunpack.c.l.b16 %v778
  %v895 = vunpack.c.l.b16 %v779
  %v896 = vunpack.c.l.b16 %v780
  %v897 = vunpack.c.l.b16 %v781
  %v898 = vunpack.c.l.b16 %v782
  %v899 = vunpack.c.l.b16 %v783
  %v900 = vunpack.c.l.b16 %v784
  %v901 = vunpack.c.l.b16 %v785
  %v902 = vunpack.c.l.b16 %v786
  %v903 = vunpack.c.l.b16 %v787
  %v904 = vpack.c.b16 %v889, %v888
  %v905 = vpack.c.b16 %v891, %v890
  %v906 = vpack.c.b16 %v893, %v892
  %v907 = vpack.c.b16 %v895, %v894
  %v908 = vpack.c.b16 %v897, %v896
  %v909 = vpack.c.b16 %v899, %v898
  %v910 = vpack.c.b16 %v901, %v900
  %v911 = vpack.c.b16 %v903, %v902
  %920 = vmatpush.bf16.msra.mxu0 %v911
  %921 = vmatpush.bf16.msra.mxu0 %v910
  %922 = vmatpush.bf16.msra.mxu0 %v909
  %923 = vmatpush.bf16.msra.mxu0 %v908
  %924 = vmatpush.bf16.msra.mxu0 %v907
  %925 = vmatpush.bf16.msra.mxu0 %v906
  %926 = vmatpush.bf16.msra.mxu0 %v905
  %927 = vmatpush.bf16.msra.mxu0 %v904
  %928 = vmatmul.bf16.gmra.mxu0 %v752
  %v929 = vpop.f32.mrf.mxu0
  %v930 = vadd.f32 %v863, %v929
  %v931 = vpop.f32.mrf.mxu0
  %v932 = vadd.f32 %v865, %v931
  %933 = vmatmul.bf16.gmra.mxu0 %v753
  %v934 = vpop.f32.mrf.mxu0
  %v935 = vadd.f32 %v868, %v934
  %v936 = vpop.f32.mrf.mxu0
  %v937 = vadd.f32 %v870, %v936
  %938 = vdwg.mxu0
  %s939 = scalar_lea.vmem %s5, 128
  %v940 = vld [vmem:[%s939] sm:$0xf]
  %v941 = vld [vmem:[%s939 + $0x4] sm:$0xf]
  %v942 = vld [vmem:[%s939 + $0x8] sm:$0xf]
  %v943 = vld [vmem:[%s939 + $0xc] sm:$0xf]
  %v944 = vld [vmem:[%s939 + $0x10] sm:$0xf]
  %v945 = vld [vmem:[%s939 + $0x14] sm:$0xf]
  %v946 = vld [vmem:[%s939 + $0x18] sm:$0xf]
  %v947 = vld [vmem:[%s939 + $0x1c] sm:$0xf]
  %v948 = vld [vmem:[%s939 + $0x20] sm:$0xf]
  %v949 = vld [vmem:[%s939 + $0x24] sm:$0xf]
  %v950 = vld [vmem:[%s939 + $0x28] sm:$0xf]
  %v951 = vld [vmem:[%s939 + $0x2c] sm:$0xf]
  %v952 = vld [vmem:[%s939 + $0x30] sm:$0xf]
  %v953 = vld [vmem:[%s939 + $0x34] sm:$0xf]
  %v954 = vld [vmem:[%s939 + $0x38] sm:$0xf]
  %v955 = vld [vmem:[%s939 + $0x3c] sm:$0xf]
  %v972 = vunpack.c.l.b16 %v940
  %v973 = vunpack.c.l.b16 %v941
  %v974 = vunpack.c.l.b16 %v942
  %v975 = vunpack.c.l.b16 %v943
  %v976 = vunpack.c.l.b16 %v944
  %v977 = vunpack.c.l.b16 %v945
  %v978 = vunpack.c.l.b16 %v946
  %v979 = vunpack.c.l.b16 %v947
  %v980 = vunpack.c.l.b16 %v948
  %v981 = vunpack.c.l.b16 %v949
  %v982 = vunpack.c.l.b16 %v950
  %v983 = vunpack.c.l.b16 %v951
  %v984 = vunpack.c.l.b16 %v952
  %v985 = vunpack.c.l.b16 %v953
  %v986 = vunpack.c.l.b16 %v954
  %v987 = vunpack.c.l.b16 %v955
  %v988 = vpack.c.b16 %v973, %v972
  %v989 = vpack.c.b16 %v975, %v974
  %v990 = vpack.c.b16 %v977, %v976
  %v991 = vpack.c.b16 %v979, %v978
  %v992 = vpack.c.b16 %v981, %v980
  %v993 = vpack.c.b16 %v983, %v982
  %v994 = vpack.c.b16 %v985, %v984
  %v995 = vpack.c.b16 %v987, %v986
  %1004 = vmatpush.bf16.msra.mxu0 %v995
  %1005 = vmatpush.bf16.msra.mxu0 %v994
  %1006 = vmatpush.bf16.msra.mxu0 %v993
  %1007 = vmatpush.bf16.msra.mxu0 %v992
  %1008 = vmatpush.bf16.msra.mxu0 %v991
  %1009 = vmatpush.bf16.msra.mxu0 %v990
  %1010 = vmatpush.bf16.msra.mxu0 %v989
  %1011 = vmatpush.bf16.msra.mxu0 %v988
  %1012 = vmatmul.bf16.gmra.mxu0 %v770
  %v1013 = vpop.f32.mrf.mxu0
  %v1014 = vadd.f32 0.0, %v1013
  %v1015 = vpop.f32.mrf.mxu0
  %v1016 = vadd.f32 0.0, %v1015
  %1017 = vmatmul.bf16.gmra.mxu0 %v771
  %v1018 = vpop.f32.mrf.mxu0
  %v1019 = vadd.f32 0.0, %v1018
  %v1020 = vpop.f32.mrf.mxu0
  %v1021 = vadd.f32 0.0, %v1020
  %1022 = vdwg.mxu0
  %v1023 = vadd.f32 %v930, %v1014
  %v1024 = vadd.f32 %v932, %v1016
  %v1025 = vadd.f32 %v935, %v1019
  %v1026 = vadd.f32 %v937, %v1021
  %v1027 = vadd.f32 %v1023, %v1024
  %v1028 = vadd.f32 %v1027, %v1025
  %v1029 = vadd.f32 %v1028, %v1026
  %v1030 = vrot.slane %v1029, 4
  %v1031 = vadd.f32 %v1029, %v1030
  %v1032 = vrot.slane %v1031, 2
  %v1033 = vadd.f32 %v1031, %v1032
  %v1034 = vrot.slane %v1033, 1
  %v1035 = vadd.f32 %v1033, %v1034
  %1036 = vrot.lane.b32.xlu0 %v1035, 8
  %v1037 = vpop.permute.xlu0 %1036
  %v1038 = vadd.f32 %v1035, %v1037
  %1039 = vrot.lane.b32.xlu0 %v1038, 16
  %v1040 = vpop.permute.xlu0 %1039
  %v1041 = vadd.f32 %v1038, %v1040
  %1042 = vrot.lane.b32.xlu0 %v1041, 32
  %v1043 = vpop.permute.xlu0 %1042
  %v1044 = vadd.f32 %v1041, %v1043
  %1045 = vrot.lane.b32.xlu0 %v1044, 64
  %v1046 = vpop.permute.xlu0 %1045
  %v1047 = vadd.f32 %v1044, %v1046
  %v1048 = vmul.f32 %v1023, %v1023
  %v1049 = vmul.f32 %v1024, %v1024
  %v1050 = vmul.f32 %v1025, %v1025
  %v1051 = vmul.f32 %v1026, %v1026
  %v1052 = vadd.f32 %v1048, %v1049
  %v1053 = vadd.f32 %v1052, %v1050
  %v1054 = vadd.f32 %v1053, %v1051
  %v1055 = vrot.slane %v1054, 4
  %v1056 = vadd.f32 %v1054, %v1055
  %v1057 = vrot.slane %v1056, 2
  %v1058 = vadd.f32 %v1056, %v1057
  %v1059 = vrot.slane %v1058, 1
  %v1060 = vadd.f32 %v1058, %v1059
  %1061 = vrot.lane.b32.xlu0 %v1060, 8
  %v1062 = vpop.permute.xlu0 %1061
  %v1063 = vadd.f32 %v1060, %v1062
  %1064 = vrot.lane.b32.xlu0 %v1063, 16
  %v1065 = vpop.permute.xlu0 %1064
  %v1066 = vadd.f32 %v1063, %v1065
  %1067 = vrot.lane.b32.xlu0 %v1066, 32
  %v1068 = vpop.permute.xlu0 %1067
  %v1069 = vadd.f32 %v1066, %v1068
  %1070 = vrot.lane.b32.xlu0 %v1069, 64
  %v1071 = vpop.permute.xlu0 %1070
  %v1072 = vadd.f32 %v1069, %v1071
  %v1073 = vmul.f32 %v1047, 0.001953125
  %v1074 = vmul.f32 %v1072, 0.001953125
  %v1075 = vmul.f32 %v1073, %v1073
  %v1076 = vsub.f32 %v1074, %v1075
  %s1077 = scalar_lea.vmem %s8, 3
  %v1078 = vld [vmem:[%s1077] sm:$0x1]
  %v1079 = vadd.f32 %v1076, 1e-05
  %v1080 = vrsqrt.pop %v1079
  %v1081 = vmul.f32 %v1080, %v1079
  %v1082 = vmul.f32 %v1081, %v1080
  %v1083 = vmul.f32 0.5, %v1082
  %v1084 = vsub.f32 1.5, %v1083
  %v1085 = vmul.f32 %v1080, %v1084
  %vm1086 = vweird.f32 %v1079
  %vm1087 = vweird.f32 %v1080
  %vm1088 = vmor %vm1086, %vm1087
  %v1089 = vsel %vm1088, %v1080, %v1085
  %v1090 = vmul.f32 %v1078, %v1089
  %s1091 = scalar_lea.vmem %s9, 3
  %v1092 = vld [vmem:[%s1091] sm:$0x1]
  %v1093 = vmul.f32 %v1073, %v1090
  %v1094 = vsub.f32 %v1092, %v1093
  %v1096 = vperm.slane %v1090, 0
  %v1098 = vmul.f32 %v1023, %v1096
  %v1099 = vmul.f32 %v1024, %v1096
  %v1100 = vmul.f32 %v1025, %v1096
  %v1101 = vmul.f32 %v1026, %v1096
  %v1103 = vperm.slane %v1094, 0
  %v1105 = vadd.f32 %v1098, %v1103
  %v1106 = vadd.f32 %v1099, %v1103
  %v1107 = vadd.f32 %v1100, %v1103
  %v1108 = vadd.f32 %v1101, %v1103
  %v1109 = vmax.f32 %v1105, 0.0
  %v1110 = vmax.f32 %v1106, 0.0
  %v1111 = vmax.f32 %v1107, 0.0
  %v1112 = vmax.f32 %v1108, 0.0
  %v1113 = vadd.f32 %v245, %v1109
  %v1114 = vadd.f32 %v246, %v1110
  %v1115 = vadd.f32 %v247, %v1111
  %v1116 = vadd.f32 %v248, %v1112
  %v1117 = vpack.c.bf16 %v1114, %v1113
  %v1118 = vpack.c.bf16 %v1116, %v1115
  %v1123 = vrot.slane %v1113, 7
  %v1124 = vrot.slane %v1114, 7
  %v1125 = vsel %vm253, %v1123, %v1124
  %v1126 = vrot.slane %v1115, 7
  %v1127 = vsel %vm253, %v1124, %v1126
  %v1128 = vrot.slane %v1116, 7
  %v1129 = vsel %vm253, %v1126, %v1128
  %v1134 = vsel %vm253, 0.0, %v1123
  %v1135 = vsel %vm270, %v1134, 0.0
  %v1136 = vsel %vm271, %v1125, 0.0
  %v1137 = vsel %vm272, %v1127, 0.0
  %v1138 = vsel %vm273, %v1129, 0.0
  %v1139 = vpack.c.bf16 %v1136, %v1135
  %v1140 = vpack.c.bf16 %v1138, %v1137
  %v1141 = vrot.slane %v1113, 1
  %v1142 = vrot.slane %v1114, 1
  %v1143 = vsel %vm280, %v1141, %v1142
  %v1144 = vrot.slane %v1115, 1
  %v1145 = vsel %vm280, %v1142, %v1144
  %v1146 = vrot.slane %v1116, 1
  %v1147 = vsel %vm280, %v1144, %v1146
  %v1152 = vsel %vm280, %v1146, 0.0
  %v1153 = vsel %vm297, %v1143, 0.0
  %v1154 = vsel %vm298, %v1145, 0.0
  %v1155 = vsel %vm299, %v1147, 0.0
  %v1156 = vsel %vm300, %v1152, 0.0
  %v1157 = vpack.c.bf16 %v1154, %v1153
  %v1158 = vpack.c.bf16 %v1156, %v1155
  %v1159 = vld [vmem:[%s6] sm:$0xf]
  %v1160 = vld [vmem:[%s6 + $0x4] sm:$0xf]
  %v1161 = vld [vmem:[%s6 + $0x8] sm:$0xf]
  %v1162 = vld [vmem:[%s6 + $0xc] sm:$0xf]
  %v1163 = vld [vmem:[%s6 + $0x10] sm:$0xf]
  %v1164 = vld [vmem:[%s6 + $0x14] sm:$0xf]
  %v1165 = vld [vmem:[%s6 + $0x18] sm:$0xf]
  %v1166 = vld [vmem:[%s6 + $0x1c] sm:$0xf]
  %v1167 = vld [vmem:[%s6 + $0x20] sm:$0xf]
  %v1168 = vld [vmem:[%s6 + $0x24] sm:$0xf]
  %v1169 = vld [vmem:[%s6 + $0x28] sm:$0xf]
  %v1170 = vld [vmem:[%s6 + $0x2c] sm:$0xf]
  %v1171 = vld [vmem:[%s6 + $0x30] sm:$0xf]
  %v1172 = vld [vmem:[%s6 + $0x34] sm:$0xf]
  %v1173 = vld [vmem:[%s6 + $0x38] sm:$0xf]
  %v1174 = vld [vmem:[%s6 + $0x3c] sm:$0xf]
  %s1175 = scalar_lea.vmem %s6, 64
  %v1176 = vld [vmem:[%s1175] sm:$0xf]
  %v1177 = vld [vmem:[%s1175 + $0x4] sm:$0xf]
  %v1178 = vld [vmem:[%s1175 + $0x8] sm:$0xf]
  %v1179 = vld [vmem:[%s1175 + $0xc] sm:$0xf]
  %v1180 = vld [vmem:[%s1175 + $0x10] sm:$0xf]
  %v1181 = vld [vmem:[%s1175 + $0x14] sm:$0xf]
  %v1182 = vld [vmem:[%s1175 + $0x18] sm:$0xf]
  %v1183 = vld [vmem:[%s1175 + $0x1c] sm:$0xf]
  %v1184 = vld [vmem:[%s1175 + $0x20] sm:$0xf]
  %v1185 = vld [vmem:[%s1175 + $0x24] sm:$0xf]
  %v1186 = vld [vmem:[%s1175 + $0x28] sm:$0xf]
  %v1187 = vld [vmem:[%s1175 + $0x2c] sm:$0xf]
  %v1188 = vld [vmem:[%s1175 + $0x30] sm:$0xf]
  %v1189 = vld [vmem:[%s1175 + $0x34] sm:$0xf]
  %v1190 = vld [vmem:[%s1175 + $0x38] sm:$0xf]
  %v1191 = vld [vmem:[%s1175 + $0x3c] sm:$0xf]
  %v1208 = vunpack.c.l.b16 %v1176
  %v1209 = vunpack.c.l.b16 %v1177
  %v1210 = vunpack.c.l.b16 %v1178
  %v1211 = vunpack.c.l.b16 %v1179
  %v1212 = vunpack.c.l.b16 %v1180
  %v1213 = vunpack.c.l.b16 %v1181
  %v1214 = vunpack.c.l.b16 %v1182
  %v1215 = vunpack.c.l.b16 %v1183
  %v1216 = vunpack.c.l.b16 %v1184
  %v1217 = vunpack.c.l.b16 %v1185
  %v1218 = vunpack.c.l.b16 %v1186
  %v1219 = vunpack.c.l.b16 %v1187
  %v1220 = vunpack.c.l.b16 %v1188
  %v1221 = vunpack.c.l.b16 %v1189
  %v1222 = vunpack.c.l.b16 %v1190
  %v1223 = vunpack.c.l.b16 %v1191
  %v1224 = vpack.c.b16 %v1209, %v1208
  %v1225 = vpack.c.b16 %v1211, %v1210
  %v1226 = vpack.c.b16 %v1213, %v1212
  %v1227 = vpack.c.b16 %v1215, %v1214
  %v1228 = vpack.c.b16 %v1217, %v1216
  %v1229 = vpack.c.b16 %v1219, %v1218
  %v1230 = vpack.c.b16 %v1221, %v1220
  %v1231 = vpack.c.b16 %v1223, %v1222
  %1240 = vmatpush.bf16.msra.mxu0 %v1231
  %1241 = vmatpush.bf16.msra.mxu0 %v1230
  %1242 = vmatpush.bf16.msra.mxu0 %v1229
  %1243 = vmatpush.bf16.msra.mxu0 %v1228
  %1244 = vmatpush.bf16.msra.mxu0 %v1227
  %1245 = vmatpush.bf16.msra.mxu0 %v1226
  %1246 = vmatpush.bf16.msra.mxu0 %v1225
  %1247 = vmatpush.bf16.msra.mxu0 %v1224
  %1248 = vmatmul.bf16.gmra.mxu0 %v1117
  %v1249 = vpop.f32.mrf.mxu0
  %v1250 = vadd.f32 0.0, %v1249
  %v1251 = vpop.f32.mrf.mxu0
  %v1252 = vadd.f32 0.0, %v1251
  %1253 = vmatmul.bf16.gmra.mxu0 %v1118
  %v1254 = vpop.f32.mrf.mxu0
  %v1255 = vadd.f32 0.0, %v1254
  %v1256 = vpop.f32.mrf.mxu0
  %v1257 = vadd.f32 0.0, %v1256
  %1258 = vdwg.mxu0
  %v1275 = vunpack.c.l.b16 %v1159
  %v1276 = vunpack.c.l.b16 %v1160
  %v1277 = vunpack.c.l.b16 %v1161
  %v1278 = vunpack.c.l.b16 %v1162
  %v1279 = vunpack.c.l.b16 %v1163
  %v1280 = vunpack.c.l.b16 %v1164
  %v1281 = vunpack.c.l.b16 %v1165
  %v1282 = vunpack.c.l.b16 %v1166
  %v1283 = vunpack.c.l.b16 %v1167
  %v1284 = vunpack.c.l.b16 %v1168
  %v1285 = vunpack.c.l.b16 %v1169
  %v1286 = vunpack.c.l.b16 %v1170
  %v1287 = vunpack.c.l.b16 %v1171
  %v1288 = vunpack.c.l.b16 %v1172
  %v1289 = vunpack.c.l.b16 %v1173
  %v1290 = vunpack.c.l.b16 %v1174
  %v1291 = vpack.c.b16 %v1276, %v1275
  %v1292 = vpack.c.b16 %v1278, %v1277
  %v1293 = vpack.c.b16 %v1280, %v1279
  %v1294 = vpack.c.b16 %v1282, %v1281
  %v1295 = vpack.c.b16 %v1284, %v1283
  %v1296 = vpack.c.b16 %v1286, %v1285
  %v1297 = vpack.c.b16 %v1288, %v1287
  %v1298 = vpack.c.b16 %v1290, %v1289
  %1307 = vmatpush.bf16.msra.mxu0 %v1298
  %1308 = vmatpush.bf16.msra.mxu0 %v1297
  %1309 = vmatpush.bf16.msra.mxu0 %v1296
  %1310 = vmatpush.bf16.msra.mxu0 %v1295
  %1311 = vmatpush.bf16.msra.mxu0 %v1294
  %1312 = vmatpush.bf16.msra.mxu0 %v1293
  %1313 = vmatpush.bf16.msra.mxu0 %v1292
  %1314 = vmatpush.bf16.msra.mxu0 %v1291
  %1315 = vmatmul.bf16.gmra.mxu0 %v1139
  %v1316 = vpop.f32.mrf.mxu0
  %v1317 = vadd.f32 %v1250, %v1316
  %v1318 = vpop.f32.mrf.mxu0
  %v1319 = vadd.f32 %v1252, %v1318
  %1320 = vmatmul.bf16.gmra.mxu0 %v1140
  %v1321 = vpop.f32.mrf.mxu0
  %v1322 = vadd.f32 %v1255, %v1321
  %v1323 = vpop.f32.mrf.mxu0
  %v1324 = vadd.f32 %v1257, %v1323
  %1325 = vdwg.mxu0
  %s1326 = scalar_lea.vmem %s6, 128
  %v1327 = vld [vmem:[%s1326] sm:$0xf]
  %v1328 = vld [vmem:[%s1326 + $0x4] sm:$0xf]
  %v1329 = vld [vmem:[%s1326 + $0x8] sm:$0xf]
  %v1330 = vld [vmem:[%s1326 + $0xc] sm:$0xf]
  %v1331 = vld [vmem:[%s1326 + $0x10] sm:$0xf]
  %v1332 = vld [vmem:[%s1326 + $0x14] sm:$0xf]
  %v1333 = vld [vmem:[%s1326 + $0x18] sm:$0xf]
  %v1334 = vld [vmem:[%s1326 + $0x1c] sm:$0xf]
  %v1335 = vld [vmem:[%s1326 + $0x20] sm:$0xf]
  %v1336 = vld [vmem:[%s1326 + $0x24] sm:$0xf]
  %v1337 = vld [vmem:[%s1326 + $0x28] sm:$0xf]
  %v1338 = vld [vmem:[%s1326 + $0x2c] sm:$0xf]
  %v1339 = vld [vmem:[%s1326 + $0x30] sm:$0xf]
  %v1340 = vld [vmem:[%s1326 + $0x34] sm:$0xf]
  %v1341 = vld [vmem:[%s1326 + $0x38] sm:$0xf]
  %v1342 = vld [vmem:[%s1326 + $0x3c] sm:$0xf]
  %v1359 = vunpack.c.l.b16 %v1327
  %v1360 = vunpack.c.l.b16 %v1328
  %v1361 = vunpack.c.l.b16 %v1329
  %v1362 = vunpack.c.l.b16 %v1330
  %v1363 = vunpack.c.l.b16 %v1331
  %v1364 = vunpack.c.l.b16 %v1332
  %v1365 = vunpack.c.l.b16 %v1333
  %v1366 = vunpack.c.l.b16 %v1334
  %v1367 = vunpack.c.l.b16 %v1335
  %v1368 = vunpack.c.l.b16 %v1336
  %v1369 = vunpack.c.l.b16 %v1337
  %v1370 = vunpack.c.l.b16 %v1338
  %v1371 = vunpack.c.l.b16 %v1339
  %v1372 = vunpack.c.l.b16 %v1340
  %v1373 = vunpack.c.l.b16 %v1341
  %v1374 = vunpack.c.l.b16 %v1342
  %v1375 = vpack.c.b16 %v1360, %v1359
  %v1376 = vpack.c.b16 %v1362, %v1361
  %v1377 = vpack.c.b16 %v1364, %v1363
  %v1378 = vpack.c.b16 %v1366, %v1365
  %v1379 = vpack.c.b16 %v1368, %v1367
  %v1380 = vpack.c.b16 %v1370, %v1369
  %v1381 = vpack.c.b16 %v1372, %v1371
  %v1382 = vpack.c.b16 %v1374, %v1373
  %1391 = vmatpush.bf16.msra.mxu0 %v1382
  %1392 = vmatpush.bf16.msra.mxu0 %v1381
  %1393 = vmatpush.bf16.msra.mxu0 %v1380
  %1394 = vmatpush.bf16.msra.mxu0 %v1379
  %1395 = vmatpush.bf16.msra.mxu0 %v1378
  %1396 = vmatpush.bf16.msra.mxu0 %v1377
  %1397 = vmatpush.bf16.msra.mxu0 %v1376
  %1398 = vmatpush.bf16.msra.mxu0 %v1375
  %1399 = vmatmul.bf16.gmra.mxu0 %v1157
  %v1400 = vpop.f32.mrf.mxu0
  %v1401 = vadd.f32 0.0, %v1400
  %v1402 = vpop.f32.mrf.mxu0
  %v1403 = vadd.f32 0.0, %v1402
  %1404 = vmatmul.bf16.gmra.mxu0 %v1158
  %v1405 = vpop.f32.mrf.mxu0
  %v1406 = vadd.f32 0.0, %v1405
  %v1407 = vpop.f32.mrf.mxu0
  %v1408 = vadd.f32 0.0, %v1407
  %1409 = vdwg.mxu0
  %v1410 = vadd.f32 %v1317, %v1401
  %v1411 = vadd.f32 %v1319, %v1403
  %v1412 = vadd.f32 %v1322, %v1406
  %v1413 = vadd.f32 %v1324, %v1408
  %v1414 = vadd.f32 %v1410, %v1411
  %v1415 = vadd.f32 %v1414, %v1412
  %v1416 = vadd.f32 %v1415, %v1413
  %v1417 = vrot.slane %v1416, 4
  %v1418 = vadd.f32 %v1416, %v1417
  %v1419 = vrot.slane %v1418, 2
  %v1420 = vadd.f32 %v1418, %v1419
  %v1421 = vrot.slane %v1420, 1
  %v1422 = vadd.f32 %v1420, %v1421
  %1423 = vrot.lane.b32.xlu0 %v1422, 8
  %v1424 = vpop.permute.xlu0 %1423
  %v1425 = vadd.f32 %v1422, %v1424
  %1426 = vrot.lane.b32.xlu0 %v1425, 16
  %v1427 = vpop.permute.xlu0 %1426
  %v1428 = vadd.f32 %v1425, %v1427
  %1429 = vrot.lane.b32.xlu0 %v1428, 32
  %v1430 = vpop.permute.xlu0 %1429
  %v1431 = vadd.f32 %v1428, %v1430
  %1432 = vrot.lane.b32.xlu0 %v1431, 64
  %v1433 = vpop.permute.xlu0 %1432
  %v1434 = vadd.f32 %v1431, %v1433
  %v1435 = vmul.f32 %v1410, %v1410
  %v1436 = vmul.f32 %v1411, %v1411
  %v1437 = vmul.f32 %v1412, %v1412
  %v1438 = vmul.f32 %v1413, %v1413
  %v1439 = vadd.f32 %v1435, %v1436
  %v1440 = vadd.f32 %v1439, %v1437
  %v1441 = vadd.f32 %v1440, %v1438
  %v1442 = vrot.slane %v1441, 4
  %v1443 = vadd.f32 %v1441, %v1442
  %v1444 = vrot.slane %v1443, 2
  %v1445 = vadd.f32 %v1443, %v1444
  %v1446 = vrot.slane %v1445, 1
  %v1447 = vadd.f32 %v1445, %v1446
  %1448 = vrot.lane.b32.xlu0 %v1447, 8
  %v1449 = vpop.permute.xlu0 %1448
  %v1450 = vadd.f32 %v1447, %v1449
  %1451 = vrot.lane.b32.xlu0 %v1450, 16
  %v1452 = vpop.permute.xlu0 %1451
  %v1453 = vadd.f32 %v1450, %v1452
  %1454 = vrot.lane.b32.xlu0 %v1453, 32
  %v1455 = vpop.permute.xlu0 %1454
  %v1456 = vadd.f32 %v1453, %v1455
  %1457 = vrot.lane.b32.xlu0 %v1456, 64
  %v1458 = vpop.permute.xlu0 %1457
  %v1459 = vadd.f32 %v1456, %v1458
  %v1460 = vmul.f32 %v1434, 0.001953125
  %v1461 = vmul.f32 %v1459, 0.001953125
  %v1462 = vmul.f32 %v1460, %v1460
  %v1463 = vsub.f32 %v1461, %v1462
  %s1464 = scalar_lea.vmem %s8, 4
  %v1465 = vld [vmem:[%s1464] sm:$0x1]
  %v1466 = vadd.f32 %v1463, 1e-05
  %v1467 = vrsqrt.pop %v1466
  %v1468 = vmul.f32 %v1467, %v1466
  %v1469 = vmul.f32 %v1468, %v1467
  %v1470 = vmul.f32 0.5, %v1469
  %v1471 = vsub.f32 1.5, %v1470
  %v1472 = vmul.f32 %v1467, %v1471
  %vm1473 = vweird.f32 %v1466
  %vm1474 = vweird.f32 %v1467
  %vm1475 = vmor %vm1473, %vm1474
  %v1476 = vsel %vm1475, %v1467, %v1472
  %v1477 = vmul.f32 %v1465, %v1476
  %s1478 = scalar_lea.vmem %s9, 4
  %v1479 = vld [vmem:[%s1478] sm:$0x1]
  %v1480 = vmul.f32 %v1460, %v1477
  %v1481 = vsub.f32 %v1479, %v1480
  %v1483 = vperm.slane %v1477, 0
  %v1485 = vmul.f32 %v1410, %v1483
  %v1486 = vmul.f32 %v1411, %v1483
  %v1487 = vmul.f32 %v1412, %v1483
  %v1488 = vmul.f32 %v1413, %v1483
  %v1490 = vperm.slane %v1481, 0
  %v1492 = vadd.f32 %v1485, %v1490
  %v1493 = vadd.f32 %v1486, %v1490
  %v1494 = vadd.f32 %v1487, %v1490
  %v1495 = vadd.f32 %v1488, %v1490
  %v1496 = vmax.f32 %v1492, 0.0
  %v1497 = vmax.f32 %v1493, 0.0
  %v1498 = vmax.f32 %v1494, 0.0
  %v1499 = vmax.f32 %v1495, 0.0
  %v1500 = vpack.c.bf16 %v1497, %v1496
  %v1501 = vpack.c.bf16 %v1499, %v1498
  %v1506 = vrot.slane %v1496, 7
  %v1507 = vrot.slane %v1497, 7
  %v1508 = vsel %vm253, %v1506, %v1507
  %v1509 = vrot.slane %v1498, 7
  %v1510 = vsel %vm253, %v1507, %v1509
  %v1511 = vrot.slane %v1499, 7
  %v1512 = vsel %vm253, %v1509, %v1511
  %v1517 = vsel %vm253, 0.0, %v1506
  %v1518 = vsel %vm270, %v1517, 0.0
  %v1519 = vsel %vm271, %v1508, 0.0
  %v1520 = vsel %vm272, %v1510, 0.0
  %v1521 = vsel %vm273, %v1512, 0.0
  %v1522 = vpack.c.bf16 %v1519, %v1518
  %v1523 = vpack.c.bf16 %v1521, %v1520
  %v1524 = vrot.slane %v1496, 1
  %v1525 = vrot.slane %v1497, 1
  %v1526 = vsel %vm280, %v1524, %v1525
  %v1527 = vrot.slane %v1498, 1
  %v1528 = vsel %vm280, %v1525, %v1527
  %v1529 = vrot.slane %v1499, 1
  %v1530 = vsel %vm280, %v1527, %v1529
  %v1535 = vsel %vm280, %v1529, 0.0
  %v1536 = vsel %vm297, %v1526, 0.0
  %v1537 = vsel %vm298, %v1528, 0.0
  %v1538 = vsel %vm299, %v1530, 0.0
  %v1539 = vsel %vm300, %v1535, 0.0
  %v1540 = vpack.c.bf16 %v1537, %v1536
  %v1541 = vpack.c.bf16 %v1539, %v1538
  %v1542 = vld [vmem:[%s7] sm:$0xf]
  %v1543 = vld [vmem:[%s7 + $0x4] sm:$0xf]
  %v1544 = vld [vmem:[%s7 + $0x8] sm:$0xf]
  %v1545 = vld [vmem:[%s7 + $0xc] sm:$0xf]
  %v1546 = vld [vmem:[%s7 + $0x10] sm:$0xf]
  %v1547 = vld [vmem:[%s7 + $0x14] sm:$0xf]
  %v1548 = vld [vmem:[%s7 + $0x18] sm:$0xf]
  %v1549 = vld [vmem:[%s7 + $0x1c] sm:$0xf]
  %v1550 = vld [vmem:[%s7 + $0x20] sm:$0xf]
  %v1551 = vld [vmem:[%s7 + $0x24] sm:$0xf]
  %v1552 = vld [vmem:[%s7 + $0x28] sm:$0xf]
  %v1553 = vld [vmem:[%s7 + $0x2c] sm:$0xf]
  %v1554 = vld [vmem:[%s7 + $0x30] sm:$0xf]
  %v1555 = vld [vmem:[%s7 + $0x34] sm:$0xf]
  %v1556 = vld [vmem:[%s7 + $0x38] sm:$0xf]
  %v1557 = vld [vmem:[%s7 + $0x3c] sm:$0xf]
  %s1558 = scalar_lea.vmem %s7, 64
  %v1559 = vld [vmem:[%s1558] sm:$0xf]
  %v1560 = vld [vmem:[%s1558 + $0x4] sm:$0xf]
  %v1561 = vld [vmem:[%s1558 + $0x8] sm:$0xf]
  %v1562 = vld [vmem:[%s1558 + $0xc] sm:$0xf]
  %v1563 = vld [vmem:[%s1558 + $0x10] sm:$0xf]
  %v1564 = vld [vmem:[%s1558 + $0x14] sm:$0xf]
  %v1565 = vld [vmem:[%s1558 + $0x18] sm:$0xf]
  %v1566 = vld [vmem:[%s1558 + $0x1c] sm:$0xf]
  %v1567 = vld [vmem:[%s1558 + $0x20] sm:$0xf]
  %v1568 = vld [vmem:[%s1558 + $0x24] sm:$0xf]
  %v1569 = vld [vmem:[%s1558 + $0x28] sm:$0xf]
  %v1570 = vld [vmem:[%s1558 + $0x2c] sm:$0xf]
  %v1571 = vld [vmem:[%s1558 + $0x30] sm:$0xf]
  %v1572 = vld [vmem:[%s1558 + $0x34] sm:$0xf]
  %v1573 = vld [vmem:[%s1558 + $0x38] sm:$0xf]
  %v1574 = vld [vmem:[%s1558 + $0x3c] sm:$0xf]
  %v1591 = vunpack.c.l.b16 %v1559
  %v1592 = vunpack.c.l.b16 %v1560
  %v1593 = vunpack.c.l.b16 %v1561
  %v1594 = vunpack.c.l.b16 %v1562
  %v1595 = vunpack.c.l.b16 %v1563
  %v1596 = vunpack.c.l.b16 %v1564
  %v1597 = vunpack.c.l.b16 %v1565
  %v1598 = vunpack.c.l.b16 %v1566
  %v1599 = vunpack.c.l.b16 %v1567
  %v1600 = vunpack.c.l.b16 %v1568
  %v1601 = vunpack.c.l.b16 %v1569
  %v1602 = vunpack.c.l.b16 %v1570
  %v1603 = vunpack.c.l.b16 %v1571
  %v1604 = vunpack.c.l.b16 %v1572
  %v1605 = vunpack.c.l.b16 %v1573
  %v1606 = vunpack.c.l.b16 %v1574
  %v1607 = vpack.c.b16 %v1592, %v1591
  %v1608 = vpack.c.b16 %v1594, %v1593
  %v1609 = vpack.c.b16 %v1596, %v1595
  %v1610 = vpack.c.b16 %v1598, %v1597
  %v1611 = vpack.c.b16 %v1600, %v1599
  %v1612 = vpack.c.b16 %v1602, %v1601
  %v1613 = vpack.c.b16 %v1604, %v1603
  %v1614 = vpack.c.b16 %v1606, %v1605
  %1623 = vmatpush.bf16.msra.mxu0 %v1614
  %1624 = vmatpush.bf16.msra.mxu0 %v1613
  %1625 = vmatpush.bf16.msra.mxu0 %v1612
  %1626 = vmatpush.bf16.msra.mxu0 %v1611
  %1627 = vmatpush.bf16.msra.mxu0 %v1610
  %1628 = vmatpush.bf16.msra.mxu0 %v1609
  %1629 = vmatpush.bf16.msra.mxu0 %v1608
  %1630 = vmatpush.bf16.msra.mxu0 %v1607
  %1631 = vmatmul.bf16.gmra.mxu0 %v1500
  %v1632 = vpop.f32.mrf.mxu0
  %v1633 = vadd.f32 0.0, %v1632
  %v1634 = vpop.f32.mrf.mxu0
  %v1635 = vadd.f32 0.0, %v1634
  %1636 = vmatmul.bf16.gmra.mxu0 %v1501
  %v1637 = vpop.f32.mrf.mxu0
  %v1638 = vadd.f32 0.0, %v1637
  %v1639 = vpop.f32.mrf.mxu0
  %v1640 = vadd.f32 0.0, %v1639
  %1641 = vdwg.mxu0
  %v1658 = vunpack.c.l.b16 %v1542
  %v1659 = vunpack.c.l.b16 %v1543
  %v1660 = vunpack.c.l.b16 %v1544
  %v1661 = vunpack.c.l.b16 %v1545
  %v1662 = vunpack.c.l.b16 %v1546
  %v1663 = vunpack.c.l.b16 %v1547
  %v1664 = vunpack.c.l.b16 %v1548
  %v1665 = vunpack.c.l.b16 %v1549
  %v1666 = vunpack.c.l.b16 %v1550
  %v1667 = vunpack.c.l.b16 %v1551
  %v1668 = vunpack.c.l.b16 %v1552
  %v1669 = vunpack.c.l.b16 %v1553
  %v1670 = vunpack.c.l.b16 %v1554
  %v1671 = vunpack.c.l.b16 %v1555
  %v1672 = vunpack.c.l.b16 %v1556
  %v1673 = vunpack.c.l.b16 %v1557
  %v1674 = vpack.c.b16 %v1659, %v1658
  %v1675 = vpack.c.b16 %v1661, %v1660
  %v1676 = vpack.c.b16 %v1663, %v1662
  %v1677 = vpack.c.b16 %v1665, %v1664
  %v1678 = vpack.c.b16 %v1667, %v1666
  %v1679 = vpack.c.b16 %v1669, %v1668
  %v1680 = vpack.c.b16 %v1671, %v1670
  %v1681 = vpack.c.b16 %v1673, %v1672
  %1690 = vmatpush.bf16.msra.mxu0 %v1681
  %1691 = vmatpush.bf16.msra.mxu0 %v1680
  %1692 = vmatpush.bf16.msra.mxu0 %v1679
  %1693 = vmatpush.bf16.msra.mxu0 %v1678
  %1694 = vmatpush.bf16.msra.mxu0 %v1677
  %1695 = vmatpush.bf16.msra.mxu0 %v1676
  %1696 = vmatpush.bf16.msra.mxu0 %v1675
  %1697 = vmatpush.bf16.msra.mxu0 %v1674
  %1698 = vmatmul.bf16.gmra.mxu0 %v1522
  %v1699 = vpop.f32.mrf.mxu0
  %v1700 = vadd.f32 %v1633, %v1699
  %v1701 = vpop.f32.mrf.mxu0
  %v1702 = vadd.f32 %v1635, %v1701
  %1703 = vmatmul.bf16.gmra.mxu0 %v1523
  %v1704 = vpop.f32.mrf.mxu0
  %v1705 = vadd.f32 %v1638, %v1704
  %v1706 = vpop.f32.mrf.mxu0
  %v1707 = vadd.f32 %v1640, %v1706
  %1708 = vdwg.mxu0
  %s1709 = scalar_lea.vmem %s7, 128
  %v1710 = vld [vmem:[%s1709] sm:$0xf]
  %v1711 = vld [vmem:[%s1709 + $0x4] sm:$0xf]
  %v1712 = vld [vmem:[%s1709 + $0x8] sm:$0xf]
  %v1713 = vld [vmem:[%s1709 + $0xc] sm:$0xf]
  %v1714 = vld [vmem:[%s1709 + $0x10] sm:$0xf]
  %v1715 = vld [vmem:[%s1709 + $0x14] sm:$0xf]
  %v1716 = vld [vmem:[%s1709 + $0x18] sm:$0xf]
  %v1717 = vld [vmem:[%s1709 + $0x1c] sm:$0xf]
  %v1718 = vld [vmem:[%s1709 + $0x20] sm:$0xf]
  %v1719 = vld [vmem:[%s1709 + $0x24] sm:$0xf]
  %v1720 = vld [vmem:[%s1709 + $0x28] sm:$0xf]
  %v1721 = vld [vmem:[%s1709 + $0x2c] sm:$0xf]
  %v1722 = vld [vmem:[%s1709 + $0x30] sm:$0xf]
  %v1723 = vld [vmem:[%s1709 + $0x34] sm:$0xf]
  %v1724 = vld [vmem:[%s1709 + $0x38] sm:$0xf]
  %v1725 = vld [vmem:[%s1709 + $0x3c] sm:$0xf]
  %v1742 = vunpack.c.l.b16 %v1710
  %v1743 = vunpack.c.l.b16 %v1711
  %v1744 = vunpack.c.l.b16 %v1712
  %v1745 = vunpack.c.l.b16 %v1713
  %v1746 = vunpack.c.l.b16 %v1714
  %v1747 = vunpack.c.l.b16 %v1715
  %v1748 = vunpack.c.l.b16 %v1716
  %v1749 = vunpack.c.l.b16 %v1717
  %v1750 = vunpack.c.l.b16 %v1718
  %v1751 = vunpack.c.l.b16 %v1719
  %v1752 = vunpack.c.l.b16 %v1720
  %v1753 = vunpack.c.l.b16 %v1721
  %v1754 = vunpack.c.l.b16 %v1722
  %v1755 = vunpack.c.l.b16 %v1723
  %v1756 = vunpack.c.l.b16 %v1724
  %v1757 = vunpack.c.l.b16 %v1725
  %v1758 = vpack.c.b16 %v1743, %v1742
  %v1759 = vpack.c.b16 %v1745, %v1744
  %v1760 = vpack.c.b16 %v1747, %v1746
  %v1761 = vpack.c.b16 %v1749, %v1748
  %v1762 = vpack.c.b16 %v1751, %v1750
  %v1763 = vpack.c.b16 %v1753, %v1752
  %v1764 = vpack.c.b16 %v1755, %v1754
  %v1765 = vpack.c.b16 %v1757, %v1756
  %1774 = vmatpush.bf16.msra.mxu0 %v1765
  %1775 = vmatpush.bf16.msra.mxu0 %v1764
  %1776 = vmatpush.bf16.msra.mxu0 %v1763
  %1777 = vmatpush.bf16.msra.mxu0 %v1762
  %1778 = vmatpush.bf16.msra.mxu0 %v1761
  %1779 = vmatpush.bf16.msra.mxu0 %v1760
  %1780 = vmatpush.bf16.msra.mxu0 %v1759
  %1781 = vmatpush.bf16.msra.mxu0 %v1758
  %1782 = vmatmul.bf16.gmra.mxu0 %v1540
  %v1783 = vpop.f32.mrf.mxu0
  %v1784 = vadd.f32 0.0, %v1783
  %v1785 = vpop.f32.mrf.mxu0
  %v1786 = vadd.f32 0.0, %v1785
  %1787 = vmatmul.bf16.gmra.mxu0 %v1541
  %v1788 = vpop.f32.mrf.mxu0
  %v1789 = vadd.f32 0.0, %v1788
  %v1790 = vpop.f32.mrf.mxu0
  %v1791 = vadd.f32 0.0, %v1790
  %1792 = vdwg.mxu0
  %v1793 = vadd.f32 %v1700, %v1784
  %v1794 = vadd.f32 %v1702, %v1786
  %v1795 = vadd.f32 %v1705, %v1789
  %v1796 = vadd.f32 %v1707, %v1791
  %v1797 = vadd.f32 %v1793, %v1794
  %v1798 = vadd.f32 %v1797, %v1795
  %v1799 = vadd.f32 %v1798, %v1796
  %v1800 = vrot.slane %v1799, 4
  %v1801 = vadd.f32 %v1799, %v1800
  %v1802 = vrot.slane %v1801, 2
  %v1803 = vadd.f32 %v1801, %v1802
  %v1804 = vrot.slane %v1803, 1
  %v1805 = vadd.f32 %v1803, %v1804
  %1806 = vrot.lane.b32.xlu0 %v1805, 8
  %v1807 = vpop.permute.xlu0 %1806
  %v1808 = vadd.f32 %v1805, %v1807
  %1809 = vrot.lane.b32.xlu0 %v1808, 16
  %v1810 = vpop.permute.xlu0 %1809
  %v1811 = vadd.f32 %v1808, %v1810
  %1812 = vrot.lane.b32.xlu0 %v1811, 32
  %v1813 = vpop.permute.xlu0 %1812
  %v1814 = vadd.f32 %v1811, %v1813
  %1815 = vrot.lane.b32.xlu0 %v1814, 64
  %v1816 = vpop.permute.xlu0 %1815
  %v1817 = vadd.f32 %v1814, %v1816
  %v1818 = vmul.f32 %v1793, %v1793
  %v1819 = vmul.f32 %v1794, %v1794
  %v1820 = vmul.f32 %v1795, %v1795
  %v1821 = vmul.f32 %v1796, %v1796
  %v1822 = vadd.f32 %v1818, %v1819
  %v1823 = vadd.f32 %v1822, %v1820
  %v1824 = vadd.f32 %v1823, %v1821
  %v1825 = vrot.slane %v1824, 4
  %v1826 = vadd.f32 %v1824, %v1825
  %v1827 = vrot.slane %v1826, 2
  %v1828 = vadd.f32 %v1826, %v1827
  %v1829 = vrot.slane %v1828, 1
  %v1830 = vadd.f32 %v1828, %v1829
  %1831 = vrot.lane.b32.xlu0 %v1830, 8
  %v1832 = vpop.permute.xlu0 %1831
  %v1833 = vadd.f32 %v1830, %v1832
  %1834 = vrot.lane.b32.xlu0 %v1833, 16
  %v1835 = vpop.permute.xlu0 %1834
  %v1836 = vadd.f32 %v1833, %v1835
  %1837 = vrot.lane.b32.xlu0 %v1836, 32
  %v1838 = vpop.permute.xlu0 %1837
  %v1839 = vadd.f32 %v1836, %v1838
  %1840 = vrot.lane.b32.xlu0 %v1839, 64
  %v1841 = vpop.permute.xlu0 %1840
  %v1842 = vadd.f32 %v1839, %v1841
  %v1843 = vmul.f32 %v1817, 0.001953125
  %v1844 = vmul.f32 %v1842, 0.001953125
  %v1845 = vmul.f32 %v1843, %v1843
  %v1846 = vsub.f32 %v1844, %v1845
  %s1847 = scalar_lea.vmem %s8, 5
  %v1848 = vld [vmem:[%s1847] sm:$0x1]
  %v1849 = vadd.f32 %v1846, 1e-05
  %v1850 = vrsqrt.pop %v1849
  %v1851 = vmul.f32 %v1850, %v1849
  %v1852 = vmul.f32 %v1851, %v1850
  %v1853 = vmul.f32 0.5, %v1852
  %v1854 = vsub.f32 1.5, %v1853
  %v1855 = vmul.f32 %v1850, %v1854
  %vm1856 = vweird.f32 %v1849
  %vm1857 = vweird.f32 %v1850
  %vm1858 = vmor %vm1856, %vm1857
  %v1859 = vsel %vm1858, %v1850, %v1855
  %v1860 = vmul.f32 %v1848, %v1859
  %s1861 = scalar_lea.vmem %s9, 5
  %v1862 = vld [vmem:[%s1861] sm:$0x1]
  %v1863 = vmul.f32 %v1843, %v1860
  %v1864 = vsub.f32 %v1862, %v1863
  %v1866 = vperm.slane %v1860, 0
  %v1868 = vmul.f32 %v1793, %v1866
  %v1869 = vmul.f32 %v1794, %v1866
  %v1870 = vmul.f32 %v1795, %v1866
  %v1871 = vmul.f32 %v1796, %v1866
  %v1873 = vperm.slane %v1864, 0
  %v1875 = vadd.f32 %v1868, %v1873
  %v1876 = vadd.f32 %v1869, %v1873
  %v1877 = vadd.f32 %v1870, %v1873
  %v1878 = vadd.f32 %v1871, %v1873
  %v1879 = vmax.f32 %v1875, 0.0
  %v1880 = vmax.f32 %v1876, 0.0
  %v1881 = vmax.f32 %v1877, 0.0
  %v1882 = vmax.f32 %v1878, 0.0
  %v1883 = vadd.f32 %v1113, %v1879
  %v1884 = vadd.f32 %v1114, %v1880
  %v1885 = vadd.f32 %v1115, %v1881
  %v1886 = vadd.f32 %v1116, %v1882
  %1887 = vst [vmem:[%s10] sm:$0xff] %v1883
  %1888 = vst [vmem:[%s10 + $0x8] sm:$0xff] %v1884
  %1889 = vst [vmem:[%s10 + $0x10] sm:$0xff] %v1885
  %1890 = vst [vmem:[%s10 + $0x18] sm:$0xff] %v1886
  // Predicated region
  $region42: #{decoder_block_forward.1} parent=0 // pred_check
    _
  $region43: #{decoder_block_forward.1} parent=0 // pred_check_branch
    %1892 = sbr.rel (0) target = $region45
  $region44: #{decoder_block_forward.1} parent=0 // pred_region
    _
  $region45: #{decoder_block_forward.1} parent=0 // pred_fallthru
    _
  // Predicated region
  $region46: #{decoder_block_forward.1} parent=0 // pred_check
    _
  $region47: #{decoder_block_forward.1} parent=0 // pred_check_branch
    %1894 = sbr.rel (0) target = $region49
  $region48: #{decoder_block_forward.1} parent=0 // pred_region
    _
  $region49: #{decoder_block_forward.1} parent=0 // pred_fallthru
    _

</llo_original>
